<compile_context>
chip_gen: v6e
topology: v6e:2x2x1
jax: 0.10.0
libtpu: 0.0.40
codegen_flags: <defaults>
</compile_context>

<pallas_src>
import jax
import jax.numpy as jnp
from jax.experimental import pallas as pl
from jax.experimental.pallas import tpu as pltpu

H_DIM = 3
META_LATENT_DIM = 4      # unused in forward (kept for parity with the module)
N_PARAMS = 64
SYSTEM_DIM = 180


# ---------------------------------------------------------------------------
# Kernel
# ---------------------------------------------------------------------------
def _disc_kernel(x0_ref, x1_ref, h_ref,
                 w64_ref, wh3_ref, wxy2_ref, wxy_ref, wcat_ref, wl3_ref,
                 b64_ref, b256_ref, bl3_ref,
                 out_ref):
    """One batch tile of the full discriminator MLP.

    w64_ref : (6, 64, 64)  = [wh0 (3->64, zero-padded to 64 rows), wh1, wh2, wl0, wl1, wl2]
    wxy2_ref: (2, 180, 64) = [wx, wy]
    wxy_ref : (128, 256), wcat_ref: (512, 64), wh3_ref: (64, 256)
    wl3_ref : (64, 128)    = wl3 zero-padded on the output dim (lane-dense store)
    b64_ref : (9, 64)      = [bh0, bh1, bh2, bx, by, bcat, bl0, bl1, bl2]
    b256_ref: (2, 256)     = [bh3, bxy]
    bl3_ref : (1, 128)     = bl3 zero-padded
    """
    f32 = jnp.float32

    def mm(v, w):
        # MXU matmul; operands in the weight dtype (bf16 or f32), f32 accumulation.
        return jnp.dot(v.astype(w.dtype), w, preferred_element_type=f32)

    def relu(t):
        return jnp.maximum(t, 0.0)

    b64 = b64_ref[...]      # (9, 64)  f32
    b256 = b256_ref[...]    # (2, 256) f32

    # ---- h branch: (h zero-padded to 64) -> 64 -> 64 -> 64 -> 256 ----
    hh = relu(mm(h_ref[...], w64_ref[0]) + b64[0:1, :])
    hh = relu(mm(hh, w64_ref[1]) + b64[1:2, :])
    hh = relu(mm(hh, w64_ref[2]) + b64[2:3, :])
    hh = relu(mm(hh, wh3_ref[...]) + b256[0:1, :])                 # (TB, 256)

    # ---- x branch: two channels, 180 -> 64 each; concat-free fuse to 256 ----
    xr = relu(mm(x0_ref[...], wxy2_ref[0]) + b64[3:4, :])          # (TB, 64)
    yr = relu(mm(x1_ref[...], wxy2_ref[1]) + b64[4:5, :])          # (TB, 64)
    xy = relu(mm(xr, wxy_ref[0:64, :])
              + mm(yr, wxy_ref[64:128, :])
              + b256[1:2, :])                                      # (TB, 256)

    # ---- fuse the two branches (concat-free split of wcat) -> 64 ----
    c = relu(mm(xy, wcat_ref[0:256, :])
             + mm(hh, wcat_ref[256:512, :])
             + b64[5:6, :])                                        # (TB, 64)

    # ---- final MLP head: 3x (64 -> 64, relu), then 64 -> 1 (padded to 128) ----
    c = relu(mm(c, w64_ref[3]) + b64[6:7, :])
    c = relu(mm(c, w64_ref[4]) + b64[7:8, :])
    c = relu(mm(c, w64_ref[5]) + b64[8:9, :])
    logits = mm(c, wl3_ref[...]) + bl3_ref[...]                    # (TB, 128); col 0 is real
    out_ref[...] = jax.nn.sigmoid(logits).astype(out_ref.dtype)


# ---------------------------------------------------------------------------
# Parameter init (PyTorch-style) and packing
# ---------------------------------------------------------------------------
def _linear_params(key, in_dim, out_dim):
    """PyTorch-style uniform(-1/sqrt(fan_in), 1/sqrt(fan_in)) init; W stored (in, out)."""
    kw, kb = jax.random.split(key)
    bound = 1.0 / (in_dim ** 0.5)
    w = jax.random.uniform(kw, (in_dim, out_dim), jnp.float32, -bound, bound)
    b = jax.random.uniform(kb, (1, out_dim), jnp.float32, -bound, bound)
    return w, b


def init_discriminator_params(key, system_dim=SYSTEM_DIM, h_dim=H_DIM):
    dims = [
        (h_dim, N_PARAMS),          # _fch_0
        (N_PARAMS, N_PARAMS),       # _fch_1
        (N_PARAMS, N_PARAMS),       # _fch_2
        (N_PARAMS, 256),            # _fch_3
        (system_dim, N_PARAMS),     # _fcx
        (system_dim, N_PARAMS),     # _fcy
        (2 * N_PARAMS, 256),        # _fcxy
        (2 * 256, N_PARAMS),        # _fccat
        (N_PARAMS, N_PARAMS),       # _layers[0]
        (N_PARAMS, N_PARAMS),       # _layers[2]
        (N_PARAMS, N_PARAMS),       # _layers[4]
        (N_PARAMS, 1),              # _layers[6]
    ]
    keys = jax.random.split(key, len(dims))
    params = []
    for k, (di, do) in zip(keys, dims):
        w, b = _linear_params(k, di, do)
        params.append(w)
        params.append(b)
    return params  # flat: [w0, b0, w1, b1, ...]


def pack_discriminator_params(params, use_bf16=True):
    """Pack the 24 small arrays into a few VMEM-friendly slabs (do this once)."""
    (wh0, bh0, wh1, bh1, wh2, bh2, wh3, bh3,
     wx, bx, wy, by, wxy, bxy, wcat, bcat,
     wl0, bl0, wl1, bl1, wl2, bl2, wl3, bl3) = params
    wdt = jnp.bfloat16 if use_bf16 else jnp.float32

    # first h layer (3 -> 64) zero-padded to a uniform (64, 64) slab entry
    wh0p = jnp.zeros((N_PARAMS, N_PARAMS), jnp.float32).at[:wh0.shape[0], :].set(wh0)
    w64 = jnp.stack([wh0p, wh1, wh2, wl0, wl1, wl2]).astype(wdt)       # (6, 64, 64)
    wxy2 = jnp.stack([wx, wy]).astype(wdt)                             # (2, 180, 64)
    wl3p = (jnp.zeros((N_PARAMS, 128), jnp.float32)
            .at[:, :wl3.shape[1]].set(wl3).astype(wdt))                # (64, 128)

    # biases stay f32 (tiny; keeps elementwise math f32 on all chips)
    b64 = jnp.concatenate([bh0, bh1, bh2, bx, by, bcat, bl0, bl1, bl2],
                          axis=0).astype(jnp.float32)                  # (9, 64)
    b256 = jnp.concatenate([bh3, bxy], axis=0).astype(jnp.float32)     # (2, 256)
    bl3p = jnp.zeros((1, 128), jnp.float32).at[:, :bl3.shape[1]].set(bl3)

    return dict(w64=w64, wh3=wh3.astype(wdt), wxy2=wxy2,
                wxy=wxy.astype(wdt), wcat=wcat.astype(wdt), wl3p=wl3p,
                b64=b64, b256=b256, bl3p=bl3p)


# ---------------------------------------------------------------------------
# Forward wrapper
# ---------------------------------------------------------------------------
def _round_up(n, m):
    return ((n + m - 1) // m) * m


def vanilla_discriminator_forward(x, h, packed, *, tile_b=256):
    """x: (B, 2, system_dim) f32, h: (B, h_dim) f32, packed: pack_discriminator_params()."""
    assert tile_b % 8 == 0, "batch tile must be a multiple of 8"
    B, nchan, sys_dim = x.shape
    assert nchan == 2
    h_dim = h.shape[1]
    assert h_dim <= N_PARAMS

    act_dt = packed["w64"].dtype                 # bf16 or f32 (matmul operand dtype)
    tile_b = min(tile_b, _round_up(B, 8))
    b_pad = _round_up(B, tile_b)

    # channel split + dtype cast in the wrapper (cheap XLA ops, keeps kernel loads
    # contiguous); h is zero-padded to 64 features so the first layer is a uniform
    # 64x64 matmul from the stacked weight slab.
    x0 = x[:, 0, :].astype(act_dt)
    x1 = x[:, 1, :].astype(act_dt)
    hp = jnp.zeros((B, N_PARAMS), act_dt).at[:, :h_dim].set(h.astype(act_dt))

    if b_pad != B:
        pad = ((0, b_pad - B), (0, 0))
        x0 = jnp.pad(x0, pad)
        x1 = jnp.pad(x1, pad)
        hp = jnp.pad(hp, pad)

    grid = (b_pad // tile_b,)

    def row_spec(cols):
        return pl.BlockSpec((tile_b, cols), lambda i: (i, 0))

    def const_spec(shape):
        nd = len(shape)
        return pl.BlockSpec(shape, lambda i, _nd=nd: (0,) * _nd)

    out = pl.pallas_call(
        _disc_kernel,
        out_shape=jax.ShapeDtypeStruct((b_pad, 128), jnp.float32),
        grid=grid,
        in_specs=[
            row_spec(sys_dim),                   # x0
            row_spec(sys_dim),                   # x1
            row_spec(N_PARAMS),                  # h (padded)
            const_spec(packed["w64"].shape),     # weights stay resident
            const_spec(packed["wh3"].shape),
            const_spec(packed["wxy2"].shape),
            const_spec(packed["wxy"].shape),
            const_spec(packed["wcat"].shape),
            const_spec(packed["wl3p"].shape),
            const_spec(packed["b64"].shape),
            const_spec(packed["b256"].shape),
            const_spec(packed["bl3p"].shape),
        ],
        out_specs=pl.BlockSpec((tile_b, 128), lambda i: (i, 0)),   # lane-dense store
        compiler_params=pltpu.CompilerParams(
            dimension_semantics=("parallel",)),
    )(x0, x1, hp,
      packed["w64"], packed["wh3"], packed["wxy2"], packed["wxy"],
      packed["wcat"], packed["wl3p"], packed["b64"], packed["b256"], packed["bl3p"])

    return out[:B, :1]                           # (B, 1), matches the PyTorch module


# ---------------------------------------------------------------------------
# Pure-JAX reference (mirrors the PyTorch forward)
# ---------------------------------------------------------------------------
def _reference_forward(x, h, params, matmul_dtype=jnp.float32):
    (wh0, bh0, wh1, bh1, wh2, bh2, wh3, bh3,
     wx, bx, wy, by, wxy, bxy, wcat, bcat,
     wl0, bl0, wl1, bl1, wl2, bl2, wl3, bl3) = params

    def lin(v, w, b):
        return jnp.dot(v.astype(matmul_dtype), w.astype(matmul_dtype),
                       preferred_element_type=jnp.float32,
                       precision=jax.lax.Precision.HIGHEST) + b

    relu = lambda t: jnp.maximum(t, 0.0)
    hh = relu(lin(h, wh0, bh0))
    hh = relu(lin(hh, wh1, bh1))
    hh = relu(lin(hh, wh2, bh2))
    hh = relu(lin(hh, wh3, bh3))
    xa, ya = x[:, 0, :], x[:, 1, :]
    xr = relu(lin(xa, wx, bx))
    yr = relu(lin(ya, wy, by))
    xy = relu(lin(jnp.concatenate([xr, yr], axis=1), wxy, bxy))
    c = relu(lin(jnp.concatenate([xy, hh], axis=1), wcat, bcat))
    c = relu(lin(c, wl0, bl0))
    c = relu(lin(c, wl1, bl1))
    c = relu(lin(c, wl2, bl2))
    return jax.nn.sigmoid(lin(c, wl3, bl3))


if __name__ == "__main__":
    key = jax.random.PRNGKey(0)
    kx, kh, kp = jax.random.split(key, 3)

    B = 40  # small, but exercises multi-step grid + batch padding (tile_b=16 -> pad to 48)
    x = jax.random.normal(kx, (B, 2, SYSTEM_DIM), jnp.float32)
    h = jax.random.normal(kh, (B, H_DIM), jnp.float32)
    params = init_discriminator_params(kp)

    # ---- f32 matmul path (v5e-friendly) ----
    packed_f32 = pack_discriminator_params(params, use_bf16=False)
    out_f32 = jax.block_until_ready(
        vanilla_discriminator_forward(x, h, packed_f32, tile_b=16))
    ref_f32 = _reference_forward(x, h, params, matmul_dtype=jnp.float32)
    assert out_f32.shape == (B, 1)
    assert jnp.allclose(out_f32, ref_f32, atol=1e-3, rtol=1e-3), (out_f32, ref_f32)

    # ---- bf16 matmul path (v6e / v7x MXU), f32 accumulation ----
    packed_bf16 = pack_discriminator_params(params, use_bf16=True)
    out_bf16 = jax.block_until_ready(
        vanilla_discriminator_forward(x, h, packed_bf16, tile_b=16))
    ref_bf16 = _reference_forward(x, h, params, matmul_dtype=jnp.bfloat16)
    assert out_bf16.shape == (B, 1)
    assert jnp.allclose(out_bf16, ref_bf16, atol=3e-3, rtol=3e-3), (out_bf16, ref_bf16)
    assert jnp.allclose(out_bf16, ref_f32, atol=3e-2, rtol=3e-2)

    print("KERNEL_OK")
</pallas_src>

<mosaic_0001>
module attributes {stable_mosaic.version = 11 : i64} {
  func.func @_disc_kernel(%arg0: i32, %arg1: memref<16x180xf32, #tpu.memory_space<vmem>>, %arg2: memref<16x180xf32, #tpu.memory_space<vmem>>, %arg3: memref<16x64xf32, #tpu.memory_space<vmem>>, %arg4: memref<6x64x64xf32, #tpu.memory_space<vmem>>, %arg5: memref<64x256xf32, #tpu.memory_space<vmem>>, %arg6: memref<2x180x64xf32, #tpu.memory_space<vmem>>, %arg7: memref<128x256xf32, #tpu.memory_space<vmem>>, %arg8: memref<512x64xf32, #tpu.memory_space<vmem>>, %arg9: memref<64x128xf32, #tpu.memory_space<vmem>>, %arg10: memref<9x64xf32, #tpu.memory_space<vmem>>, %arg11: memref<2x256xf32, #tpu.memory_space<vmem>>, %arg12: memref<1x128xf32, #tpu.memory_space<vmem>>, %arg13: memref<16x128xf32, #tpu.memory_space<vmem>>) attributes {dimension_semantics = [#tpu.dimension_semantics<parallel>], iteration_bounds = array<i64: 3>, scalar_prefetch = 0 : i64, scratch_operands = 0 : i64, tpu.core_type = #tpu.core_type<tc>, window_params = [{transform_indices = @transform_0, window_bounds = array<i64: 16, 180>}, {transform_indices = @transform_1, window_bounds = array<i64: 16, 180>}, {transform_indices = @transform_2, window_bounds = array<i64: 16, 64>}, {pipeline_mode = #tpu.pipeline_mode<synchronous>, transform_indices = @transform_3, window_bounds = array<i64: 6, 64, 64>}, {pipeline_mode = #tpu.pipeline_mode<synchronous>, transform_indices = @transform_4, window_bounds = array<i64: 64, 256>}, {pipeline_mode = #tpu.pipeline_mode<synchronous>, transform_indices = @transform_5, window_bounds = array<i64: 2, 180, 64>}, {pipeline_mode = #tpu.pipeline_mode<synchronous>, transform_indices = @transform_6, window_bounds = array<i64: 128, 256>}, {pipeline_mode = #tpu.pipeline_mode<synchronous>, transform_indices = @transform_7, window_bounds = array<i64: 512, 64>}, {pipeline_mode = #tpu.pipeline_mode<synchronous>, transform_indices = @transform_8, window_bounds = array<i64: 64, 128>}, {pipeline_mode = #tpu.pipeline_mode<synchronous>, transform_indices = @transform_9, window_bounds = array<i64: 9, 64>}, {pipeline_mode = #tpu.pipeline_mode<synchronous>, transform_indices = @transform_10, window_bounds = array<i64: 2, 256>}, {pipeline_mode = #tpu.pipeline_mode<synchronous>, transform_indices = @transform_11, window_bounds = array<i64: 1, 128>}, {transform_indices = @transform_12, window_bounds = array<i64: 16, 128>}]} {
    %c0 = arith.constant 0 : index
    %c0_0 = arith.constant 0 : index
    %0 = vector.load %arg10[%c0, %c0_0] : memref<9x64xf32, #tpu.memory_space<vmem>>, vector<9x64xf32>
    %c0_1 = arith.constant 0 : index
    %c0_2 = arith.constant 0 : index
    %1 = vector.load %arg11[%c0_1, %c0_2] : memref<2x256xf32, #tpu.memory_space<vmem>>, vector<2x256xf32>
    %c0_3 = arith.constant 0 : index
    %c0_4 = arith.constant 0 : index
    %2 = vector.load %arg3[%c0_3, %c0_4] : memref<16x64xf32, #tpu.memory_space<vmem>>, vector<16x64xf32>
    %c0_5 = arith.constant 0 : index
    %c0_6 = arith.constant 0 : index
    %c0_7 = arith.constant 0 : index
    %3 = vector.load %arg4[%c0_5, %c0_6, %c0_7] : memref<6x64x64xf32, #tpu.memory_space<vmem>>, vector<1x64x64xf32>
    %4 = vector.shape_cast %3 : vector<1x64x64xf32> to vector<64x64xf32>
    %cst = arith.constant dense<0.000000e+00> : vector<16x64xf32>
    %5 = tpu.matmul %2, %4, %cst {dimension_numbers = #tpu.dot_dimension_numbers<[1], [0], [0], [1], [0, 0, 1, 1], [], []>} : vector<16x64xf32>, vector<64x64xf32>, vector<16x64xf32> -> vector<16x64xf32>
    %6 = vector.extract_strided_slice %0 {offsets = [0, 0], sizes = [1, 64], strides = [1, 1]} : vector<9x64xf32> to vector<1x64xf32>
    %7 = vector.broadcast %6 : vector<1x64xf32> to vector<16x64xf32>
    %8 = arith.addf %5, %7 : vector<16x64xf32>
    %cst_8 = arith.constant 0.000000e+00 : f32
    %9 = vector.broadcast %cst_8 : f32 to vector<16x64xf32>
    %10 = arith.maximumf %8, %9 : vector<16x64xf32>
    %c1 = arith.constant 1 : index
    %c0_9 = arith.constant 0 : index
    %c0_10 = arith.constant 0 : index
    %11 = vector.load %arg4[%c1, %c0_9, %c0_10] : memref<6x64x64xf32, #tpu.memory_space<vmem>>, vector<1x64x64xf32>
    %12 = vector.shape_cast %11 : vector<1x64x64xf32> to vector<64x64xf32>
    %cst_11 = arith.constant dense<0.000000e+00> : vector<16x64xf32>
    %13 = tpu.matmul %10, %12, %cst_11 {dimension_numbers = #tpu.dot_dimension_numbers<[1], [0], [0], [1], [0, 0, 1, 1], [], []>} : vector<16x64xf32>, vector<64x64xf32>, vector<16x64xf32> -> vector<16x64xf32>
    %14 = vector.extract_strided_slice %0 {offsets = [1, 0], sizes = [1, 64], strides = [1, 1]} : vector<9x64xf32> to vector<1x64xf32>
    %15 = vector.broadcast %14 : vector<1x64xf32> to vector<16x64xf32>
    %16 = arith.addf %13, %15 : vector<16x64xf32>
    %cst_12 = arith.constant 0.000000e+00 : f32
    %17 = vector.broadcast %cst_12 : f32 to vector<16x64xf32>
    %18 = arith.maximumf %16, %17 : vector<16x64xf32>
    %c2 = arith.constant 2 : index
    %c0_13 = arith.constant 0 : index
    %c0_14 = arith.constant 0 : index
    %19 = vector.load %arg4[%c2, %c0_13, %c0_14] : memref<6x64x64xf32, #tpu.memory_space<vmem>>, vector<1x64x64xf32>
    %20 = vector.shape_cast %19 : vector<1x64x64xf32> to vector<64x64xf32>
    %cst_15 = arith.constant dense<0.000000e+00> : vector<16x64xf32>
    %21 = tpu.matmul %18, %20, %cst_15 {dimension_numbers = #tpu.dot_dimension_numbers<[1], [0], [0], [1], [0, 0, 1, 1], [], []>} : vector<16x64xf32>, vector<64x64xf32>, vector<16x64xf32> -> vector<16x64xf32>
    %22 = vector.extract_strided_slice %0 {offsets = [2, 0], sizes = [1, 64], strides = [1, 1]} : vector<9x64xf32> to vector<1x64xf32>
    %23 = vector.broadcast %22 : vector<1x64xf32> to vector<16x64xf32>
    %24 = arith.addf %21, %23 : vector<16x64xf32>
    %cst_16 = arith.constant 0.000000e+00 : f32
    %25 = vector.broadcast %cst_16 : f32 to vector<16x64xf32>
    %26 = arith.maximumf %24, %25 : vector<16x64xf32>
    %c0_17 = arith.constant 0 : index
    %c0_18 = arith.constant 0 : index
    %27 = vector.load %arg5[%c0_17, %c0_18] : memref<64x256xf32, #tpu.memory_space<vmem>>, vector<64x256xf32>
    %cst_19 = arith.constant dense<0.000000e+00> : vector<16x256xf32>
    %28 = tpu.matmul %26, %27, %cst_19 {dimension_numbers = #tpu.dot_dimension_numbers<[1], [0], [0], [1], [0, 0, 1, 1], [], []>} : vector<16x64xf32>, vector<64x256xf32>, vector<16x256xf32> -> vector<16x256xf32>
    %29 = vector.extract_strided_slice %1 {offsets = [0, 0], sizes = [1, 256], strides = [1, 1]} : vector<2x256xf32> to vector<1x256xf32>
    %30 = vector.broadcast %29 : vector<1x256xf32> to vector<16x256xf32>
    %31 = arith.addf %28, %30 : vector<16x256xf32>
    %cst_20 = arith.constant 0.000000e+00 : f32
    %32 = vector.broadcast %cst_20 : f32 to vector<16x256xf32>
    %33 = arith.maximumf %31, %32 : vector<16x256xf32>
    %c0_21 = arith.constant 0 : index
    %c0_22 = arith.constant 0 : index
    %34 = vector.load %arg1[%c0_21, %c0_22] : memref<16x180xf32, #tpu.memory_space<vmem>>, vector<16x180xf32>
    %c0_23 = arith.constant 0 : index
    %c0_24 = arith.constant 0 : index
    %c0_25 = arith.constant 0 : index
    %35 = vector.load %arg6[%c0_23, %c0_24, %c0_25] : memref<2x180x64xf32, #tpu.memory_space<vmem>>, vector<1x180x64xf32>
    %36 = vector.shape_cast %35 : vector<1x180x64xf32> to vector<180x64xf32>
    %cst_26 = arith.constant dense<0.000000e+00> : vector<16x64xf32>
    %37 = tpu.matmul %34, %36, %cst_26 {dimension_numbers = #tpu.dot_dimension_numbers<[1], [0], [0], [1], [0, 0, 1, 1], [], []>} : vector<16x180xf32>, vector<180x64xf32>, vector<16x64xf32> -> vector<16x64xf32>
    %38 = vector.extract_strided_slice %0 {offsets = [3, 0], sizes = [1, 64], strides = [1, 1]} : vector<9x64xf32> to vector<1x64xf32>
    %39 = vector.broadcast %38 : vector<1x64xf32> to vector<16x64xf32>
    %40 = arith.addf %37, %39 : vector<16x64xf32>
    %cst_27 = arith.constant 0.000000e+00 : f32
    %41 = vector.broadcast %cst_27 : f32 to vector<16x64xf32>
    %42 = arith.maximumf %40, %41 : vector<16x64xf32>
    %c0_28 = arith.constant 0 : index
    %c0_29 = arith.constant 0 : index
    %43 = vector.load %arg2[%c0_28, %c0_29] : memref<16x180xf32, #tpu.memory_space<vmem>>, vector<16x180xf32>
    %c1_30 = arith.constant 1 : index
    %c0_31 = arith.constant 0 : index
    %c0_32 = arith.constant 0 : index
    %44 = vector.load %arg6[%c1_30, %c0_31, %c0_32] : memref<2x180x64xf32, #tpu.memory_space<vmem>>, vector<1x180x64xf32>
    %45 = vector.shape_cast %44 : vector<1x180x64xf32> to vector<180x64xf32>
    %cst_33 = arith.constant dense<0.000000e+00> : vector<16x64xf32>
    %46 = tpu.matmul %43, %45, %cst_33 {dimension_numbers = #tpu.dot_dimension_numbers<[1], [0], [0], [1], [0, 0, 1, 1], [], []>} : vector<16x180xf32>, vector<180x64xf32>, vector<16x64xf32> -> vector<16x64xf32>
    %47 = vector.extract_strided_slice %0 {offsets = [4, 0], sizes = [1, 64], strides = [1, 1]} : vector<9x64xf32> to vector<1x64xf32>
    %48 = vector.broadcast %47 : vector<1x64xf32> to vector<16x64xf32>
    %49 = arith.addf %46, %48 : vector<16x64xf32>
    %cst_34 = arith.constant 0.000000e+00 : f32
    %50 = vector.broadcast %cst_34 : f32 to vector<16x64xf32>
    %51 = arith.maximumf %49, %50 : vector<16x64xf32>
    %c0_35 = arith.constant 0 : index
    %c0_36 = arith.constant 0 : index
    %52 = vector.load %arg7[%c0_35, %c0_36] : memref<128x256xf32, #tpu.memory_space<vmem>>, vector<64x256xf32>
    %cst_37 = arith.constant dense<0.000000e+00> : vector<16x256xf32>
    %53 = tpu.matmul %42, %52, %cst_37 {dimension_numbers = #tpu.dot_dimension_numbers<[1], [0], [0], [1], [0, 0, 1, 1], [], []>} : vector<16x64xf32>, vector<64x256xf32>, vector<16x256xf32> -> vector<16x256xf32>
    %c64 = arith.constant 64 : index
    %c0_38 = arith.constant 0 : index
    %54 = vector.load %arg7[%c64, %c0_38] : memref<128x256xf32, #tpu.memory_space<vmem>>, vector<64x256xf32>
    %cst_39 = arith.constant dense<0.000000e+00> : vector<16x256xf32>
    %55 = tpu.matmul %51, %54, %cst_39 {dimension_numbers = #tpu.dot_dimension_numbers<[1], [0], [0], [1], [0, 0, 1, 1], [], []>} : vector<16x64xf32>, vector<64x256xf32>, vector<16x256xf32> -> vector<16x256xf32>
    %56 = arith.addf %53, %55 : vector<16x256xf32>
    %57 = vector.extract_strided_slice %1 {offsets = [1, 0], sizes = [1, 256], strides = [1, 1]} : vector<2x256xf32> to vector<1x256xf32>
    %58 = vector.broadcast %57 : vector<1x256xf32> to vector<16x256xf32>
    %59 = arith.addf %56, %58 : vector<16x256xf32>
    %cst_40 = arith.constant 0.000000e+00 : f32
    %60 = vector.broadcast %cst_40 : f32 to vector<16x256xf32>
    %61 = arith.maximumf %59, %60 : vector<16x256xf32>
    %c0_41 = arith.constant 0 : index
    %c0_42 = arith.constant 0 : index
    %62 = vector.load %arg8[%c0_41, %c0_42] : memref<512x64xf32, #tpu.memory_space<vmem>>, vector<256x64xf32>
    %cst_43 = arith.constant dense<0.000000e+00> : vector<16x64xf32>
    %63 = tpu.matmul %61, %62, %cst_43 {dimension_numbers = #tpu.dot_dimension_numbers<[1], [0], [0], [1], [0, 0, 1, 1], [], []>} : vector<16x256xf32>, vector<256x64xf32>, vector<16x64xf32> -> vector<16x64xf32>
    %c256 = arith.constant 256 : index
    %c0_44 = arith.constant 0 : index
    %64 = vector.load %arg8[%c256, %c0_44] : memref<512x64xf32, #tpu.memory_space<vmem>>, vector<256x64xf32>
    %cst_45 = arith.constant dense<0.000000e+00> : vector<16x64xf32>
    %65 = tpu.matmul %33, %64, %cst_45 {dimension_numbers = #tpu.dot_dimension_numbers<[1], [0], [0], [1], [0, 0, 1, 1], [], []>} : vector<16x256xf32>, vector<256x64xf32>, vector<16x64xf32> -> vector<16x64xf32>
    %66 = arith.addf %63, %65 : vector<16x64xf32>
    %67 = vector.extract_strided_slice %0 {offsets = [5, 0], sizes = [1, 64], strides = [1, 1]} : vector<9x64xf32> to vector<1x64xf32>
    %68 = vector.broadcast %67 : vector<1x64xf32> to vector<16x64xf32>
    %69 = arith.addf %66, %68 : vector<16x64xf32>
    %cst_46 = arith.constant 0.000000e+00 : f32
    %70 = vector.broadcast %cst_46 : f32 to vector<16x64xf32>
    %71 = arith.maximumf %69, %70 : vector<16x64xf32>
    %c3 = arith.constant 3 : index
    %c0_47 = arith.constant 0 : index
    %c0_48 = arith.constant 0 : index
    %72 = vector.load %arg4[%c3, %c0_47, %c0_48] : memref<6x64x64xf32, #tpu.memory_space<vmem>>, vector<1x64x64xf32>
    %73 = vector.shape_cast %72 : vector<1x64x64xf32> to vector<64x64xf32>
    %cst_49 = arith.constant dense<0.000000e+00> : vector<16x64xf32>
    %74 = tpu.matmul %71, %73, %cst_49 {dimension_numbers = #tpu.dot_dimension_numbers<[1], [0], [0], [1], [0, 0, 1, 1], [], []>} : vector<16x64xf32>, vector<64x64xf32>, vector<16x64xf32> -> vector<16x64xf32>
    %75 = vector.extract_strided_slice %0 {offsets = [6, 0], sizes = [1, 64], strides = [1, 1]} : vector<9x64xf32> to vector<1x64xf32>
    %76 = vector.broadcast %75 : vector<1x64xf32> to vector<16x64xf32>
    %77 = arith.addf %74, %76 : vector<16x64xf32>
    %cst_50 = arith.constant 0.000000e+00 : f32
    %78 = vector.broadcast %cst_50 : f32 to vector<16x64xf32>
    %79 = arith.maximumf %77, %78 : vector<16x64xf32>
    %c4 = arith.constant 4 : index
    %c0_51 = arith.constant 0 : index
    %c0_52 = arith.constant 0 : index
    %80 = vector.load %arg4[%c4, %c0_51, %c0_52] : memref<6x64x64xf32, #tpu.memory_space<vmem>>, vector<1x64x64xf32>
    %81 = vector.shape_cast %80 : vector<1x64x64xf32> to vector<64x64xf32>
    %cst_53 = arith.constant dense<0.000000e+00> : vector<16x64xf32>
    %82 = tpu.matmul %79, %81, %cst_53 {dimension_numbers = #tpu.dot_dimension_numbers<[1], [0], [0], [1], [0, 0, 1, 1], [], []>} : vector<16x64xf32>, vector<64x64xf32>, vector<16x64xf32> -> vector<16x64xf32>
    %83 = vector.extract_strided_slice %0 {offsets = [7, 0], sizes = [1, 64], strides = [1, 1]} : vector<9x64xf32> to vector<1x64xf32>
    %84 = vector.broadcast %83 : vector<1x64xf32> to vector<16x64xf32>
    %85 = arith.addf %82, %84 : vector<16x64xf32>
    %cst_54 = arith.constant 0.000000e+00 : f32
    %86 = vector.broadcast %cst_54 : f32 to vector<16x64xf32>
    %87 = arith.maximumf %85, %86 : vector<16x64xf32>
    %c5 = arith.constant 5 : index
    %c0_55 = arith.constant 0 : index
    %c0_56 = arith.constant 0 : index
    %88 = vector.load %arg4[%c5, %c0_55, %c0_56] : memref<6x64x64xf32, #tpu.memory_space<vmem>>, vector<1x64x64xf32>
    %89 = vector.shape_cast %88 : vector<1x64x64xf32> to vector<64x64xf32>
    %cst_57 = arith.constant dense<0.000000e+00> : vector<16x64xf32>
    %90 = tpu.matmul %87, %89, %cst_57 {dimension_numbers = #tpu.dot_dimension_numbers<[1], [0], [0], [1], [0, 0, 1, 1], [], []>} : vector<16x64xf32>, vector<64x64xf32>, vector<16x64xf32> -> vector<16x64xf32>
    %91 = vector.extract_strided_slice %0 {offsets = [8, 0], sizes = [1, 64], strides = [1, 1]} : vector<9x64xf32> to vector<1x64xf32>
    %92 = vector.broadcast %91 : vector<1x64xf32> to vector<16x64xf32>
    %93 = arith.addf %90, %92 : vector<16x64xf32>
    %cst_58 = arith.constant 0.000000e+00 : f32
    %94 = vector.broadcast %cst_58 : f32 to vector<16x64xf32>
    %95 = arith.maximumf %93, %94 : vector<16x64xf32>
    %c0_59 = arith.constant 0 : index
    %c0_60 = arith.constant 0 : index
    %96 = vector.load %arg9[%c0_59, %c0_60] : memref<64x128xf32, #tpu.memory_space<vmem>>, vector<64x128xf32>
    %cst_61 = arith.constant dense<0.000000e+00> : vector<16x128xf32>
    %97 = tpu.matmul %95, %96, %cst_61 {dimension_numbers = #tpu.dot_dimension_numbers<[1], [0], [0], [1], [0, 0, 1, 1], [], []>} : vector<16x64xf32>, vector<64x128xf32>, vector<16x128xf32> -> vector<16x128xf32>
    %c0_62 = arith.constant 0 : index
    %c0_63 = arith.constant 0 : index
    %98 = vector.load %arg12[%c0_62, %c0_63] : memref<1x128xf32, #tpu.memory_space<vmem>>, vector<1x128xf32>
    %99 = vector.broadcast %98 : vector<1x128xf32> to vector<16x128xf32>
    %100 = arith.addf %97, %99 : vector<16x128xf32>
    %101 = arith.negf %100 : vector<16x128xf32>
    %102 = math.exp %101 : vector<16x128xf32>
    %cst_64 = arith.constant 1.000000e+00 : f32
    %103 = vector.broadcast %cst_64 : f32 to vector<16x128xf32>
    %104 = arith.addf %103, %102 : vector<16x128xf32>
    %105 = arith.divf %103, %104 : vector<16x128xf32>
    %c0_65 = arith.constant 0 : index
    %c0_66 = arith.constant 0 : index
    %106 = vector.load %arg13[%c0_65, %c0_66] : memref<16x128xf32, #tpu.memory_space<vmem>>, vector<16x128xf32>
    tpu.vector_store %arg13[%c0_65, %c0_66], %105 {strides = array<i32>} : memref<16x128xf32, #tpu.memory_space<vmem>>, vector<16x128xf32>,
    return
  }
  func.func @transform_0(%arg0: i32) -> (i32, i32) {
    %c0_i32 = arith.constant 0 : i32
    %c0_i32_0 = arith.constant 0 : i32
    return %arg0, %c0_i32 : i32, i32
  }
  func.func @transform_1(%arg0: i32) -> (i32, i32) {
    %c0_i32 = arith.constant 0 : i32
    %c0_i32_0 = arith.constant 0 : i32
    return %arg0, %c0_i32 : i32, i32
  }
  func.func @transform_2(%arg0: i32) -> (i32, i32) {
    %c0_i32 = arith.constant 0 : i32
    %c0_i32_0 = arith.constant 0 : i32
    return %arg0, %c0_i32 : i32, i32
  }
  func.func @transform_3(%arg0: i32) -> (i32, i32, i32) {
    %c0_i32 = arith.constant 0 : i32
    %c0_i32_0 = arith.constant 0 : i32
    %c0_i32_1 = arith.constant 0 : i32
    %c0_i32_2 = arith.constant 0 : i32
    return %c0_i32, %c0_i32_0, %c0_i32_1 : i32, i32, i32
  }
  func.func @transform_4(%arg0: i32) -> (i32, i32) {
    %c0_i32 = arith.constant 0 : i32
    %c0_i32_0 = arith.constant 0 : i32
    %c0_i32_1 = arith.constant 0 : i32
    return %c0_i32, %c0_i32_0 : i32, i32
  }
  func.func @transform_5(%arg0: i32) -> (i32, i32, i32) {
    %c0_i32 = arith.constant 0 : i32
    %c0_i32_0 = arith.constant 0 : i32
    %c0_i32_1 = arith.constant 0 : i32
    %c0_i32_2 = arith.constant 0 : i32
    return %c0_i32, %c0_i32_0, %c0_i32_1 : i32, i32, i32
  }
  func.func @transform_6(%arg0: i32) -> (i32, i32) {
    %c0_i32 = arith.constant 0 : i32
    %c0_i32_0 = arith.constant 0 : i32
    %c0_i32_1 = arith.constant 0 : i32
    return %c0_i32, %c0_i32_0 : i32, i32
  }
  func.func @transform_7(%arg0: i32) -> (i32, i32) {
    %c0_i32 = arith.constant 0 : i32
    %c0_i32_0 = arith.constant 0 : i32
    %c0_i32_1 = arith.constant 0 : i32
    return %c0_i32, %c0_i32_0 : i32, i32
  }
  func.func @transform_8(%arg0: i32) -> (i32, i32) {
    %c0_i32 = arith.constant 0 : i32
    %c0_i32_0 = arith.constant 0 : i32
    %c0_i32_1 = arith.constant 0 : i32
    return %c0_i32, %c0_i32_0 : i32, i32
  }
  func.func @transform_9(%arg0: i32) -> (i32, i32) {
    %c0_i32 = arith.constant 0 : i32
    %c0_i32_0 = arith.constant 0 : i32
    %c0_i32_1 = arith.constant 0 : i32
    return %c0_i32, %c0_i32_0 : i32, i32
  }
  func.func @transform_10(%arg0: i32) -> (i32, i32) {
    %c0_i32 = arith.constant 0 : i32
    %c0_i32_0 = arith.constant 0 : i32
    %c0_i32_1 = arith.constant 0 : i32
    return %c0_i32, %c0_i32_0 : i32, i32
  }
  func.func @transform_11(%arg0: i32) -> (i32, i32) {
    %c0_i32 = arith.constant 0 : i32
    %c0_i32_0 = arith.constant 0 : i32
    %c0_i32_1 = arith.constant 0 : i32
    return %c0_i32, %c0_i32_0 : i32, i32
  }
  func.func @transform_12(%arg0: i32) -> (i32, i32) {
    %c0_i32 = arith.constant 0 : i32
    %c0_i32_0 = arith.constant 0 : i32
    return %arg0, %c0_i32 : i32, i32
  }
}

</mosaic_0001>

<llo_original>
// kernel: tpu_custom_call.1
$region0: #{tpu_custom_call.1}
  #allocation0 [shape = 'u32[]', space=smem, size = 0x4, offset = 0x4, fixed_abs, tag = 'smem constant byte address 0x4 - core index']
  #allocation1 [shape = 'u32[144,128]{1,0:T(1,128)}', space=vmem, size = 0x12000, scoped, tag = 'internal scratch']
  %s0 = inlined_call_operand.vmem [shape: f32[48,180], index: 0, kind: input, shape index: {}]
  %s1 = inlined_call_operand.vmem [shape: f32[48,180], index: 1, kind: input, shape index: {}]
  %s2 = inlined_call_operand.vmem [shape: f32[48,64], index: 2, kind: input, shape index: {}]
  %s3 = inlined_call_operand.vmem [shape: f32[6,64,64], index: 3, kind: input, shape index: {}]
  %s4 = inlined_call_operand.vmem [shape: f32[64,256], index: 4, kind: input, shape index: {}]
  %s5 = inlined_call_operand.vmem [shape: f32[2,180,64], index: 5, kind: input, shape index: {}]
  %s6 = inlined_call_operand.vmem [shape: f32[128,256], index: 6, kind: input, shape index: {}]
  %s7 = inlined_call_operand.vmem [shape: f32[512,64], index: 7, kind: input, shape index: {}]
  %s8 = inlined_call_operand.vmem [shape: f32[64,128], index: 8, kind: input, shape index: {}]
  %s9 = inlined_call_operand.vmem [shape: f32[9,64], index: 9, kind: input, shape index: {}]
  %s10 = inlined_call_operand.vmem [shape: f32[2,256], index: 10, kind: input, shape index: {}]
  %s11 = inlined_call_operand.vmem [shape: f32[1,128], index: 11, kind: input, shape index: {}]
  %s12 = inlined_call_operand.hbm [shape: f32[48,128], index: 12, kind: output, shape index: {}]
  %s13 = sld [smem:[#allocation0]]
  $region81: #{tpu_custom_call.1} parent=0
    _
  %s15 = ssub.s32 1, %s13
  %s16 = scalar_select 0, %s15, %s13
  $region1: #{tpu_custom_call.1} parent=0
    #allocation2 [shape = 'u8[16384]{0}', space=vmem, size = 0x4000, scoped, tag = 'output window, operand 0']
    #allocation3 [shape = 's32[2]{0}', space=sflag, size = 0x8, scoped, tag = 'scoped memory for tpu_custom_call.1']
    %17 = vsyncpa [#allocation3], 0
    %s18 = scalar_lea.sflag [#allocation3], 1
    %19 = vsyncpa %s18, 0
    loop: start=0, step=1, limit=5
    $region2: #{tpu_custom_call.1} parent=1 // loop_pre_header
      _
    $region3: #{tpu_custom_call.1} parent=1 // loop_header
      %s21 = sphi 0, %s25
      %p22 = scmp.ge.s32.totalorder %s21, 5
      %s31 = sphi 0, %s33
      %s34 = sphi 0, %s31
      %s35 = sphi 0, %s34
      %s51 = sphi 0, %s35
      %s57 = sphi 0, %s59
      %s60 = sphi 0, %s57
      %s61 = sphi 0, %s60
      %s77 = sphi 0, %s61
      %s83 = sphi 0, %s85
      %s86 = sphi 0, %s83
      %s87 = sphi 0, %s86
      %s103 = sphi 0, %s87
      %s107 = sphi 0, %s107
      %s109 = sphi 0, %s107
      %s110 = sphi 0, %s109
      %s124 = sphi 0, %s110
      %s128 = sphi 0, %s128
      %s130 = sphi 0, %s128
      %s131 = sphi 0, %s130
      %s145 = sphi 0, %s131
      %s149 = sphi 0, %s149
      %s151 = sphi 0, %s149
      %s152 = sphi 0, %s151
      %s166 = sphi 0, %s152
      %s170 = sphi 0, %s170
      %s172 = sphi 0, %s170
      %s173 = sphi 0, %s172
      %s187 = sphi 0, %s173
      %s191 = sphi 0, %s191
      %s193 = sphi 0, %s191
      %s194 = sphi 0, %s193
      %s208 = sphi 0, %s194
      %s212 = sphi 0, %s212
      %s214 = sphi 0, %s212
      %s215 = sphi 0, %s214
      %s229 = sphi 0, %s215
      %s233 = sphi 0, %s233
      %s235 = sphi 0, %s233
      %s236 = sphi 0, %s235
      %s250 = sphi 0, %s236
      %s254 = sphi 0, %s254
      %s256 = sphi 0, %s254
      %s257 = sphi 0, %s256
      %s271 = sphi 0, %s257
      %s275 = sphi 0, %s275
      %s277 = sphi 0, %s275
      %s278 = sphi 0, %s277
      %s292 = sphi 0, %s278
      %s298 = sphi 0, %s300
      %s301 = sphi 0, %s298
      %s302 = sphi 0, %s301
      %s318 = sphi 0, %s302
    $region4: #{tpu_custom_call.1} parent=1 // loop_header_branch
      %24 = sbr.rel (%p22) target = $region8
    $region5: #{tpu_custom_call.1} parent=1 // loop_body
      %s26 = ssub.s32 %s21, 1
      %s27 = ssub.s32 %s21, 2
      %s28 = sadd.s32 %s21, 1
      %s29 = ssub.s32 %s21, %s28
      %p30 = scmp.eq.s32.totalorder %s29, 0
      %s32 = sadd.s32 %s31, 1
      %s33 = scalar_select %p30, %s31, %s32
      %p36 = pneg %p30
      %p37 = scmp.eq.s32.totalorder %s21, 2
      %p38 = por %p36, %p37
      %p39 = scmp.ne.s32.totalorder %s31, %s34
      %p40 = scmp.eq.s32.totalorder %s21, 0
      %p41 = por %p39, %p40
      %p42 = scmp.ne.s32.totalorder %s31, %s34
      %p43 = scmp.eq.s32.totalorder %s26, 2
      %p44 = por %p42, %p43
      %p45 = scmp.ne.s32.totalorder %s34, %s35
      %p46 = scmp.eq.s32.totalorder %s26, 0
      %p47 = por %p45, %p46
      %p48 = scmp.ne.s32.totalorder %s34, %s35
      %p49 = scmp.eq.s32.totalorder %s27, 2
      %p50 = por %p48, %p49
      %p52 = scmp.ne.s32.totalorder %s35, %s51
      %p53 = scmp.eq.s32.totalorder %s27, 0
      %p54 = por %p52, %p53
      %s55 = ssub.s32 %s21, %s28
      %p56 = scmp.eq.s32.totalorder %s55, 0
      %s58 = sadd.s32 %s57, 1
      %s59 = scalar_select %p56, %s57, %s58
      %p62 = pneg %p56
      %p63 = scmp.eq.s32.totalorder %s21, 2
      %p64 = por %p62, %p63
      %p65 = scmp.ne.s32.totalorder %s57, %s60
      %p66 = scmp.eq.s32.totalorder %s21, 0
      %p67 = por %p65, %p66
      %p68 = scmp.ne.s32.totalorder %s57, %s60
      %p69 = scmp.eq.s32.totalorder %s26, 2
      %p70 = por %p68, %p69
      %p71 = scmp.ne.s32.totalorder %s60, %s61
      %p72 = scmp.eq.s32.totalorder %s26, 0
      %p73 = por %p71, %p72
      %p74 = scmp.ne.s32.totalorder %s60, %s61
      %p75 = scmp.eq.s32.totalorder %s27, 2
      %p76 = por %p74, %p75
      %p78 = scmp.ne.s32.totalorder %s61, %s77
      %p79 = scmp.eq.s32.totalorder %s27, 0
      %p80 = por %p78, %p79
      %s81 = ssub.s32 %s21, %s28
      %p82 = scmp.eq.s32.totalorder %s81, 0
      %s84 = sadd.s32 %s83, 1
      %s85 = scalar_select %p82, %s83, %s84
      %p88 = pneg %p82
      %p89 = scmp.eq.s32.totalorder %s21, 2
      %p90 = por %p88, %p89
      %p91 = scmp.ne.s32.totalorder %s83, %s86
      %p92 = scmp.eq.s32.totalorder %s21, 0
      %p93 = por %p91, %p92
      %p94 = scmp.ne.s32.totalorder %s83, %s86
      %p95 = scmp.eq.s32.totalorder %s26, 2
      %p96 = por %p94, %p95
      %p97 = scmp.ne.s32.totalorder %s86, %s87
      %p98 = scmp.eq.s32.totalorder %s26, 0
      %p99 = por %p97, %p98
      %p100 = scmp.ne.s32.totalorder %s86, %s87
      %p101 = scmp.eq.s32.totalorder %s27, 2
      %p102 = por %p100, %p101
      %p104 = scmp.ne.s32.totalorder %s87, %s103
      %p105 = scmp.eq.s32.totalorder %s27, 0
      %p106 = por %p104, %p105
      %s108 = sadd.s32 %s107, 1
      %p111 = scmp.eq.s32.totalorder %s21, 2
      %p112 = scmp.ne.s32.totalorder %s107, %s109
      %p113 = scmp.eq.s32.totalorder %s21, 0
      %p114 = por %p112, %p113
      %p115 = scmp.ne.s32.totalorder %s107, %s109
      %p116 = scmp.eq.s32.totalorder %s26, 2
      %p117 = por %p115, %p116
      %p118 = scmp.ne.s32.totalorder %s109, %s110
      %p119 = scmp.eq.s32.totalorder %s26, 0
      %p120 = por %p118, %p119
      %p121 = scmp.ne.s32.totalorder %s109, %s110
      %p122 = scmp.eq.s32.totalorder %s27, 2
      %p123 = por %p121, %p122
      %p125 = scmp.ne.s32.totalorder %s110, %s124
      %p126 = scmp.eq.s32.totalorder %s27, 0
      %p127 = por %p125, %p126
      %s129 = sadd.s32 %s128, 1
      %p132 = scmp.eq.s32.totalorder %s21, 2
      %p133 = scmp.ne.s32.totalorder %s128, %s130
      %p134 = scmp.eq.s32.totalorder %s21, 0
      %p135 = por %p133, %p134
      %p136 = scmp.ne.s32.totalorder %s128, %s130
      %p137 = scmp.eq.s32.totalorder %s26, 2
      %p138 = por %p136, %p137
      %p139 = scmp.ne.s32.totalorder %s130, %s131
      %p140 = scmp.eq.s32.totalorder %s26, 0
      %p141 = por %p139, %p140
      %p142 = scmp.ne.s32.totalorder %s130, %s131
      %p143 = scmp.eq.s32.totalorder %s27, 2
      %p144 = por %p142, %p143
      %p146 = scmp.ne.s32.totalorder %s131, %s145
      %p147 = scmp.eq.s32.totalorder %s27, 0
      %p148 = por %p146, %p147
      %s150 = sadd.s32 %s149, 1
      %p153 = scmp.eq.s32.totalorder %s21, 2
      %p154 = scmp.ne.s32.totalorder %s149, %s151
      %p155 = scmp.eq.s32.totalorder %s21, 0
      %p156 = por %p154, %p155
      %p157 = scmp.ne.s32.totalorder %s149, %s151
      %p158 = scmp.eq.s32.totalorder %s26, 2
      %p159 = por %p157, %p158
      %p160 = scmp.ne.s32.totalorder %s151, %s152
      %p161 = scmp.eq.s32.totalorder %s26, 0
      %p162 = por %p160, %p161
      %p163 = scmp.ne.s32.totalorder %s151, %s152
      %p164 = scmp.eq.s32.totalorder %s27, 2
      %p165 = por %p163, %p164
      %p167 = scmp.ne.s32.totalorder %s152, %s166
      %p168 = scmp.eq.s32.totalorder %s27, 0
      %p169 = por %p167, %p168
      %s171 = sadd.s32 %s170, 1
      %p174 = scmp.eq.s32.totalorder %s21, 2
      %p175 = scmp.ne.s32.totalorder %s170, %s172
      %p176 = scmp.eq.s32.totalorder %s21, 0
      %p177 = por %p175, %p176
      %p178 = scmp.ne.s32.totalorder %s170, %s172
      %p179 = scmp.eq.s32.totalorder %s26, 2
      %p180 = por %p178, %p179
      %p181 = scmp.ne.s32.totalorder %s172, %s173
      %p182 = scmp.eq.s32.totalorder %s26, 0
      %p183 = por %p181, %p182
      %p184 = scmp.ne.s32.totalorder %s172, %s173
      %p185 = scmp.eq.s32.totalorder %s27, 2
      %p186 = por %p184, %p185
      %p188 = scmp.ne.s32.totalorder %s173, %s187
      %p189 = scmp.eq.s32.totalorder %s27, 0
      %p190 = por %p188, %p189
      %s192 = sadd.s32 %s191, 1
      %p195 = scmp.eq.s32.totalorder %s21, 2
      %p196 = scmp.ne.s32.totalorder %s191, %s193
      %p197 = scmp.eq.s32.totalorder %s21, 0
      %p198 = por %p196, %p197
      %p199 = scmp.ne.s32.totalorder %s191, %s193
      %p200 = scmp.eq.s32.totalorder %s26, 2
      %p201 = por %p199, %p200
      %p202 = scmp.ne.s32.totalorder %s193, %s194
      %p203 = scmp.eq.s32.totalorder %s26, 0
      %p204 = por %p202, %p203
      %p205 = scmp.ne.s32.totalorder %s193, %s194
      %p206 = scmp.eq.s32.totalorder %s27, 2
      %p207 = por %p205, %p206
      %p209 = scmp.ne.s32.totalorder %s194, %s208
      %p210 = scmp.eq.s32.totalorder %s27, 0
      %p211 = por %p209, %p210
      %s213 = sadd.s32 %s212, 1
      %p216 = scmp.eq.s32.totalorder %s21, 2
      %p217 = scmp.ne.s32.totalorder %s212, %s214
      %p218 = scmp.eq.s32.totalorder %s21, 0
      %p219 = por %p217, %p218
      %p220 = scmp.ne.s32.totalorder %s212, %s214
      %p221 = scmp.eq.s32.totalorder %s26, 2
      %p222 = por %p220, %p221
      %p223 = scmp.ne.s32.totalorder %s214, %s215
      %p224 = scmp.eq.s32.totalorder %s26, 0
      %p225 = por %p223, %p224
      %p226 = scmp.ne.s32.totalorder %s214, %s215
      %p227 = scmp.eq.s32.totalorder %s27, 2
      %p228 = por %p226, %p227
      %p230 = scmp.ne.s32.totalorder %s215, %s229
      %p231 = scmp.eq.s32.totalorder %s27, 0
      %p232 = por %p230, %p231
      %s234 = sadd.s32 %s233, 1
      %p237 = scmp.eq.s32.totalorder %s21, 2
      %p238 = scmp.ne.s32.totalorder %s233, %s235
      %p239 = scmp.eq.s32.totalorder %s21, 0
      %p240 = por %p238, %p239
      %p241 = scmp.ne.s32.totalorder %s233, %s235
      %p242 = scmp.eq.s32.totalorder %s26, 2
      %p243 = por %p241, %p242
      %p244 = scmp.ne.s32.totalorder %s235, %s236
      %p245 = scmp.eq.s32.totalorder %s26, 0
      %p246 = por %p244, %p245
      %p247 = scmp.ne.s32.totalorder %s235, %s236
      %p248 = scmp.eq.s32.totalorder %s27, 2
      %p249 = por %p247, %p248
      %p251 = scmp.ne.s32.totalorder %s236, %s250
      %p252 = scmp.eq.s32.totalorder %s27, 0
      %p253 = por %p251, %p252
      %s255 = sadd.s32 %s254, 1
      %p258 = scmp.eq.s32.totalorder %s21, 2
      %p259 = scmp.ne.s32.totalorder %s254, %s256
      %p260 = scmp.eq.s32.totalorder %s21, 0
      %p261 = por %p259, %p260
      %p262 = scmp.ne.s32.totalorder %s254, %s256
      %p263 = scmp.eq.s32.totalorder %s26, 2
      %p264 = por %p262, %p263
      %p265 = scmp.ne.s32.totalorder %s256, %s257
      %p266 = scmp.eq.s32.totalorder %s26, 0
      %p267 = por %p265, %p266
      %p268 = scmp.ne.s32.totalorder %s256, %s257
      %p269 = scmp.eq.s32.totalorder %s27, 2
      %p270 = por %p268, %p269
      %p272 = scmp.ne.s32.totalorder %s257, %s271
      %p273 = scmp.eq.s32.totalorder %s27, 0
      %p274 = por %p272, %p273
      %s276 = sadd.s32 %s275, 1
      %p279 = scmp.eq.s32.totalorder %s21, 2
      %p280 = scmp.ne.s32.totalorder %s275, %s277
      %p281 = scmp.eq.s32.totalorder %s21, 0
      %p282 = por %p280, %p281
      %p283 = scmp.ne.s32.totalorder %s275, %s277
      %p284 = scmp.eq.s32.totalorder %s26, 2
      %p285 = por %p283, %p284
      %p286 = scmp.ne.s32.totalorder %s277, %s278
      %p287 = scmp.eq.s32.totalorder %s26, 0
      %p288 = por %p286, %p287
      %p289 = scmp.ne.s32.totalorder %s277, %s278
      %p290 = scmp.eq.s32.totalorder %s27, 2
      %p291 = por %p289, %p290
      %p293 = scmp.ne.s32.totalorder %s278, %s292
      %p294 = scmp.eq.s32.totalorder %s27, 0
      %p295 = por %p293, %p294
      %s296 = ssub.s32 %s21, %s28
      %p297 = scmp.eq.s32.totalorder %s296, 0
      %s299 = sadd.s32 %s298, 1
      %s300 = scalar_select %p297, %s298, %s299
      %p303 = pneg %p297
      %p304 = scmp.eq.s32.totalorder %s21, 2
      %p305 = por %p303, %p304
      %p306 = scmp.ne.s32.totalorder %s298, %s301
      %p307 = scmp.eq.s32.totalorder %s21, 0
      %p308 = por %p306, %p307
      %p309 = scmp.ne.s32.totalorder %s298, %s301
      %p310 = scmp.eq.s32.totalorder %s26, 2
      %p311 = por %p309, %p310
      %p312 = scmp.ne.s32.totalorder %s301, %s302
      %p313 = scmp.eq.s32.totalorder %s26, 0
      %p314 = por %p312, %p313
      %p315 = scmp.ne.s32.totalorder %s301, %s302
      %p316 = scmp.eq.s32.totalorder %s27, 2
      %p317 = por %p315, %p316
      %p319 = scmp.ne.s32.totalorder %s302, %s318
      %p320 = scmp.eq.s32.totalorder %s27, 0
      %p321 = por %p319, %p320
      %p322 = scmp.le.s32.totalorder 1, %s21
      %p323 = scmp.lt.s32.totalorder %s21, 4
      %p324 = pnand %p322, %p323
      %p325 = pneg %p324
      // Predicated region
      $region9: #{tpu_custom_call.1} parent=5 // pred_check
        _
      $region10: #{tpu_custom_call.1} parent=5 // pred_check_branch
        %327 = sbr.rel (%p324) target = $region12
      $region11: #{tpu_custom_call.1} parent=5 // pred_region
        %s328 = ssub.s32 %s21, 1
        // Predicated region
        $region13: #{tpu_custom_call.1} parent=11 // pred_check
          %p329 = pneg %p120
        $region14: #{tpu_custom_call.1} parent=11 // pred_check_branch
          %331 = sbr.rel (%p329) target = $region16
        $region15: #{tpu_custom_call.1} parent=11 // pred_region
          _
        $region16: #{tpu_custom_call.1} parent=11 // pred_fallthru
          _
        // Predicated region
        $region17: #{tpu_custom_call.1} parent=11 // pred_check
          %p332 = pneg %p141
        $region18: #{tpu_custom_call.1} parent=11 // pred_check_branch
          %334 = sbr.rel (%p332) target = $region20
        $region19: #{tpu_custom_call.1} parent=11 // pred_region
          _
        $region20: #{tpu_custom_call.1} parent=11 // pred_fallthru
          _
        // Predicated region
        $region21: #{tpu_custom_call.1} parent=11 // pred_check
          %p335 = pneg %p162
        $region22: #{tpu_custom_call.1} parent=11 // pred_check_branch
          %337 = sbr.rel (%p335) target = $region24
        $region23: #{tpu_custom_call.1} parent=11 // pred_region
          _
        $region24: #{tpu_custom_call.1} parent=11 // pred_fallthru
          _
        // Predicated region
        $region25: #{tpu_custom_call.1} parent=11 // pred_check
          %p338 = pneg %p183
        $region26: #{tpu_custom_call.1} parent=11 // pred_check_branch
          %340 = sbr.rel (%p338) target = $region28
        $region27: #{tpu_custom_call.1} parent=11 // pred_region
          _
        $region28: #{tpu_custom_call.1} parent=11 // pred_fallthru
          _
        // Predicated region
        $region29: #{tpu_custom_call.1} parent=11 // pred_check
          %p341 = pneg %p204
        $region30: #{tpu_custom_call.1} parent=11 // pred_check_branch
          %343 = sbr.rel (%p341) target = $region32
        $region31: #{tpu_custom_call.1} parent=11 // pred_region
          _
        $region32: #{tpu_custom_call.1} parent=11 // pred_fallthru
          _
        // Predicated region
        $region33: #{tpu_custom_call.1} parent=11 // pred_check
          %p344 = pneg %p225
        $region34: #{tpu_custom_call.1} parent=11 // pred_check_branch
          %346 = sbr.rel (%p344) target = $region36
        $region35: #{tpu_custom_call.1} parent=11 // pred_region
          _
        $region36: #{tpu_custom_call.1} parent=11 // pred_fallthru
          _
        // Predicated region
        $region37: #{tpu_custom_call.1} parent=11 // pred_check
          %p347 = pneg %p246
        $region38: #{tpu_custom_call.1} parent=11 // pred_check_branch
          %349 = sbr.rel (%p347) target = $region40
        $region39: #{tpu_custom_call.1} parent=11 // pred_region
          _
        $region40: #{tpu_custom_call.1} parent=11 // pred_fallthru
          _
        // Predicated region
        $region41: #{tpu_custom_call.1} parent=11 // pred_check
          %p350 = pneg %p267
        $region42: #{tpu_custom_call.1} parent=11 // pred_check_branch
          %352 = sbr.rel (%p350) target = $region44
        $region43: #{tpu_custom_call.1} parent=11 // pred_region
          _
        $region44: #{tpu_custom_call.1} parent=11 // pred_fallthru
          _
        // Predicated region
        $region45: #{tpu_custom_call.1} parent=11 // pred_check
          %p353 = pneg %p288
        $region46: #{tpu_custom_call.1} parent=11 // pred_check_branch
          %355 = sbr.rel (%p353) target = $region48
        $region47: #{tpu_custom_call.1} parent=11 // pred_region
          _
        $region48: #{tpu_custom_call.1} parent=11 // pred_fallthru
          _
      $region12: #{tpu_custom_call.1} parent=5 // pred_fallthru
        _
      %p356 = scmp.lt.s32.totalorder %s21, 3
      // Predicated region
      $region49: #{tpu_custom_call.1} parent=5 // pred_check
        %p357 = pneg %p356
      $region50: #{tpu_custom_call.1} parent=5 // pred_check_branch
        %359 = sbr.rel (%p357) target = $region52
      $region51: #{tpu_custom_call.1} parent=5 // pred_region
        // Predicated region
        $region53: #{tpu_custom_call.1} parent=51 // pred_check
          %p360 = pneg %p41
        $region54: #{tpu_custom_call.1} parent=51 // pred_check_branch
          %362 = sbr.rel (%p360) target = $region56
        $region55: #{tpu_custom_call.1} parent=51 // pred_region
          %s363 = smul.u32 2, %s21
          %p364 = scmp.lt.s32.totalorder %s363, 5
          %s365 = scalar_select %p364, %s363, 5
          %s366 = smul.addr %s365, 2
          %s367 = smul.addr %s366, 8
          %s368 = scalar_lea.vmem %s0, %s367
          %s369 = smul.u32 2, %s21
        $region56: #{tpu_custom_call.1} parent=51 // pred_fallthru
          _
        // Predicated region
        $region57: #{tpu_custom_call.1} parent=51 // pred_check
          %p370 = pneg %p67
        $region58: #{tpu_custom_call.1} parent=51 // pred_check_branch
          %372 = sbr.rel (%p370) target = $region60
        $region59: #{tpu_custom_call.1} parent=51 // pred_region
          %s373 = smul.u32 2, %s21
          %p374 = scmp.lt.s32.totalorder %s373, 5
          %s375 = scalar_select %p374, %s373, 5
          %s376 = smul.addr %s375, 2
          %s377 = smul.addr %s376, 8
          %s378 = scalar_lea.vmem %s1, %s377
          %s379 = smul.u32 2, %s21
        $region60: #{tpu_custom_call.1} parent=51 // pred_fallthru
          _
        // Predicated region
        $region61: #{tpu_custom_call.1} parent=51 // pred_check
          %p380 = pneg %p93
        $region62: #{tpu_custom_call.1} parent=51 // pred_check_branch
          %382 = sbr.rel (%p380) target = $region64
        $region63: #{tpu_custom_call.1} parent=51 // pred_region
          %s383 = smul.u32 2, %s21
          %p384 = scmp.lt.s32.totalorder %s383, 5
          %s385 = scalar_select %p384, %s383, 5
          %s386 = smul.addr %s385, 8
          %s387 = scalar_lea.vmem %s2, %s386
          %s388 = smul.u32 2, %s21
        $region64: #{tpu_custom_call.1} parent=51 // pred_fallthru
          _
      $region52: #{tpu_custom_call.1} parent=5 // pred_fallthru
        _
      %p389 = scmp.le.s32.totalorder 1, %s21
      %p390 = scmp.lt.s32.totalorder %s21, 4
      %p391 = pnand %p389, %p390
      %p392 = pneg %p391
      // Predicated region
      $region65: #{tpu_custom_call.1} parent=5 // pred_check
        _
      $region66: #{tpu_custom_call.1} parent=5 // pred_check_branch
        %394 = sbr.rel (%p391) target = $region68
      $region67: #{tpu_custom_call.1} parent=5 // pred_region
        %s395 = ssub.s32 %s21, 1
        %s396 = smul.u32 2, %s26
        %p397 = scmp.lt.s32.totalorder %s396, 5
        %s398 = scalar_select %p397, %s396, 5
        %s399 = smul.addr %s398, 2
        %s400 = smul.addr %s399, 8
        %s401 = scalar_lea.vmem %s0, %s400
        %p402 = pneg %p47
        %p403 = pneg %p44
        %s404 = smul.u32 2, %s26
        %p405 = scmp.lt.s32.totalorder %s404, 5
        %s406 = scalar_select %p405, %s404, 5
        %s407 = smul.addr %s406, 2
        %s408 = smul.addr %s407, 8
        %s409 = scalar_lea.vmem %s1, %s408
        %p410 = pneg %p73
        %p411 = pneg %p70
        %s412 = smul.u32 2, %s26
        %p413 = scmp.lt.s32.totalorder %s412, 5
        %s414 = scalar_select %p413, %s412, 5
        %s415 = smul.addr %s414, 8
        %s416 = scalar_lea.vmem %s2, %s415
        %p417 = pneg %p99
        %p418 = pneg %p96
        %p419 = pneg %p120
        %p420 = pneg %p117
        %p421 = pneg %p141
        %p422 = pneg %p138
        %p423 = pneg %p162
        %p424 = pneg %p159
        %p425 = pneg %p183
        %p426 = pneg %p180
        %p427 = pneg %p204
        %p428 = pneg %p201
        %p429 = pneg %p225
        %p430 = pneg %p222
        %p431 = pneg %p246
        %p432 = pneg %p243
        %p433 = pneg %p267
        %p434 = pneg %p264
        %p435 = pneg %p288
        %p436 = pneg %p285
        %p437 = pneg %p314
        %p438 = pneg %p311
        %s439 = sand.u32 %s301, 1
        %s440 = scalar_lea.sflag [#allocation3], %s439
        %s441 = sand.u32 %s301, 1
        %s442 = smul.addr %s441, 16
        %s443 = scalar_lea.vmem [#allocation2], %s442
        %s444 = smul.u32 2, %s26
        %p445 = scmp.lt.s32.totalorder %s444, 5
        %s446 = scalar_select %p445, %s444, 5
        %s447 = smul.addr %s446, 2
        %s448 = smul.addr %s447, 8
        %s449 = scalar_lea.vmem %s0, %s448
        %s450 = smul.u32 2, %s26
        %s451 = smul.u32 2, %s26
        %p452 = scmp.lt.s32.totalorder %s451, 5
        %s453 = scalar_select %p452, %s451, 5
        %s454 = smul.addr %s453, 2
        %s455 = smul.addr %s454, 8
        %s456 = scalar_lea.vmem %s1, %s455
        %s457 = smul.u32 2, %s26
        %s458 = smul.u32 2, %s26
        %p459 = scmp.lt.s32.totalorder %s458, 5
        %s460 = scalar_select %p459, %s458, 5
        %s461 = smul.addr %s460, 8
        %s462 = scalar_lea.vmem %s2, %s461
        %s463 = smul.u32 2, %s26
        %s464 = smul.u32 2, %s26
        %v465 = vld [vmem:[%s9] sm:$0xff]
        %v466 = vld [vmem:[%s9 + $0x8] sm:$0x1]
        %v467 = vld [vmem:[%s10] sm:$0xf]
        %v468 = vld [vmem:[%s462] sm:$0xff]
        %v469 = vld [vmem:[%s462 + $0x8] sm:$0xff]
        %v470 = vld [vmem:[%s3] sm:$0xff]
        %v471 = vld [vmem:[%s3 + $0x8] sm:$0xff]
        %v472 = vld [vmem:[%s3 + $0x10] sm:$0xff]
        %v473 = vld [vmem:[%s3 + $0x18] sm:$0xff]
        %v474 = vld [vmem:[%s3 + $0x20] sm:$0xff]
        %v475 = vld [vmem:[%s3 + $0x28] sm:$0xff]
        %v476 = vld [vmem:[%s3 + $0x30] sm:$0xff]
        %v477 = vld [vmem:[%s3 + $0x38] sm:$0xff]
        %v478 = vlaneseq
        %v479 = vshrl.u32 %v478, 7
        %v480 = vsub.s32 0, %v479
        %v481 = vrot.slane %v465, %v480
        %vm482 = vcmask 523264
        %v484 = vsel %vm482, %v468, 0
        %v487 = vsel %vm482, %v469, 0
        %489 = vmatprep.subr.mxu0 0.0
        %490 = vmatpush1.msra.mxu0 0.0
        %491 = vmatprep.subr.mxu0 0.0
        %492 = vmatpush1.msra.mxu0 0.0
        %493 = vmatprep.subr.mxu0 0.0
        %494 = vmatpush1.msra.mxu0 0.0
        %495 = vmatprep.subr.mxu0 0.0
        %496 = vmatpush1.msra.mxu0 0.0
        %497 = vmatprep.subr.mxu0 0.0
        %498 = vmatpush1.msra.mxu0 0.0
        %499 = vmatprep.subr.mxu0 0.0
        %500 = vmatpush1.msra.mxu0 0.0
        %501 = vmatprep.subr.mxu0 0.0
        %502 = vmatpush1.msra.mxu0 0.0
        %503 = vmatprep.subr.mxu0 0.0
        %504 = vmatpush1.msra.mxu0 0.0
        %505 = vmatprep.subr.mxu0 0.0
        %506 = vmatpush1.msra.mxu0 %v477
        %507 = vmatprep.subr.mxu0 0.0
        %508 = vmatpush1.msra.mxu0 %v476
        %509 = vmatprep.subr.mxu0 0.0
        %510 = vmatpush1.msra.mxu0 %v475
        %511 = vmatprep.subr.mxu0 0.0
        %512 = vmatpush1.msra.mxu0 %v474
        %513 = vmatprep.subr.mxu0 0.0
        %514 = vmatpush1.msra.mxu0 %v473
        %515 = vmatprep.subr.mxu0 0.0
        %516 = vmatpush1.msra.mxu0 %v472
        %517 = vmatprep.subr.mxu0 0.0
        %518 = vmatpush1.msra.mxu0 %v471
        %519 = vmatprep.subr.mxu0 0.0
        %520 = vmatpush1.msra.mxu0 %v470
        %521 = vmatprep.subr.mxu0 0.0
        %522 = vmatpush2.msra.mxu0 0.0
        %523 = vmatprep.subr.mxu0 0.0
        %524 = vmatpush2.msra.mxu0 0.0
        %525 = vmatprep.subr.mxu0 0.0
        %526 = vmatpush2.msra.mxu0 0.0
        %527 = vmatprep.subr.mxu0 0.0
        %528 = vmatpush2.msra.mxu0 0.0
        %529 = vmatprep.subr.mxu0 0.0
        %530 = vmatpush2.msra.mxu0 0.0
        %531 = vmatprep.subr.mxu0 0.0
        %532 = vmatpush2.msra.mxu0 0.0
        %533 = vmatprep.subr.mxu0 0.0
        %534 = vmatpush2.msra.mxu0 0.0
        %535 = vmatprep.subr.mxu0 0.0
        %536 = vmatpush2.msra.mxu0 0.0
        %537 = vmatprep.subr.mxu0 0.0
        %538 = vmatpush2.msra.mxu0 0.0
        %539 = vmatprep.subr.mxu0 0.0
        %540 = vmatpush2.msra.mxu0 0.0
        %541 = vmatprep.subr.mxu0 0.0
        %542 = vmatpush2.msra.mxu0 0.0
        %543 = vmatprep.subr.mxu0 0.0
        %544 = vmatpush2.msra.mxu0 0.0
        %545 = vmatprep.subr.mxu0 0.0
        %546 = vmatpush2.msra.mxu0 0.0
        %547 = vmatprep.subr.mxu0 0.0
        %548 = vmatpush2.msra.mxu0 0.0
        %549 = vmatprep.subr.mxu0 0.0
        %550 = vmatpush2.msra.mxu0 0.0
        %551 = vmatprep.subr.mxu0 0.0
        %552 = vmatpush2.msra.mxu0 0.0
        %553 = vmatprep.mubr.f32.mxu0 0.0
        %554 = vmatmul.mubr.f32.gmra.mxu0 %v484
        %v555 = vpop.f32.mrf.mxu0
        %v556 = vadd.f32 %v481, %v555
        %v557 = vpop.f32.mrf.mxu0
        %558 = vmatprep.mubr.f32.mxu0 0.0
        %559 = vmatmul.mubr.f32.gmra.mxu0 %v487
        %v560 = vpop.f32.mrf.mxu0
        %v561 = vadd.f32 %v481, %v560
        %v562 = vpop.f32.mrf.mxu0
        %563 = vdwg.mxu0
        %v564 = vmax.f32 %v556, 0.0
        %v565 = vmax.f32 %v561, 0.0
        %s566 = scalar_lea.vmem %s3, 64
        %v567 = vld [vmem:[%s566] sm:$0xff]
        %v568 = vld [vmem:[%s566 + $0x8] sm:$0xff]
        %v569 = vld [vmem:[%s566 + $0x10] sm:$0xff]
        %v570 = vld [vmem:[%s566 + $0x18] sm:$0xff]
        %v571 = vld [vmem:[%s566 + $0x20] sm:$0xff]
        %v572 = vld [vmem:[%s566 + $0x28] sm:$0xff]
        %v573 = vld [vmem:[%s566 + $0x30] sm:$0xff]
        %v574 = vld [vmem:[%s566 + $0x38] sm:$0xff]
        %v575 = vlaneseq
        %v576 = vshrl.u32 %v575, 7
        %v577 = vsub.s32 1, %v576
        %v578 = vrot.slane %v465, %v577
        %v580 = vsel %vm482, %v564, 0
        %v583 = vsel %vm482, %v565, 0
        %585 = vmatprep.subr.mxu0 0.0
        %586 = vmatpush1.msra.mxu0 0.0
        %587 = vmatprep.subr.mxu0 0.0
        %588 = vmatpush1.msra.mxu0 0.0
        %589 = vmatprep.subr.mxu0 0.0
        %590 = vmatpush1.msra.mxu0 0.0
        %591 = vmatprep.subr.mxu0 0.0
        %592 = vmatpush1.msra.mxu0 0.0
        %593 = vmatprep.subr.mxu0 0.0
        %594 = vmatpush1.msra.mxu0 0.0
        %595 = vmatprep.subr.mxu0 0.0
        %596 = vmatpush1.msra.mxu0 0.0
        %597 = vmatprep.subr.mxu0 0.0
        %598 = vmatpush1.msra.mxu0 0.0
        %599 = vmatprep.subr.mxu0 0.0
        %600 = vmatpush1.msra.mxu0 0.0
        %601 = vmatprep.subr.mxu0 0.0
        %602 = vmatpush1.msra.mxu0 %v574
        %603 = vmatprep.subr.mxu0 0.0
        %604 = vmatpush1.msra.mxu0 %v573
        %605 = vmatprep.subr.mxu0 0.0
        %606 = vmatpush1.msra.mxu0 %v572
        %607 = vmatprep.subr.mxu0 0.0
        %608 = vmatpush1.msra.mxu0 %v571
        %609 = vmatprep.subr.mxu0 0.0
        %610 = vmatpush1.msra.mxu0 %v570
        %611 = vmatprep.subr.mxu0 0.0
        %612 = vmatpush1.msra.mxu0 %v569
        %613 = vmatprep.subr.mxu0 0.0
        %614 = vmatpush1.msra.mxu0 %v568
        %615 = vmatprep.subr.mxu0 0.0
        %616 = vmatpush1.msra.mxu0 %v567
        %617 = vmatprep.subr.mxu0 0.0
        %618 = vmatpush2.msra.mxu0 0.0
        %619 = vmatprep.subr.mxu0 0.0
        %620 = vmatpush2.msra.mxu0 0.0
        %621 = vmatprep.subr.mxu0 0.0
        %622 = vmatpush2.msra.mxu0 0.0
        %623 = vmatprep.subr.mxu0 0.0
        %624 = vmatpush2.msra.mxu0 0.0
        %625 = vmatprep.subr.mxu0 0.0
        %626 = vmatpush2.msra.mxu0 0.0
        %627 = vmatprep.subr.mxu0 0.0
        %628 = vmatpush2.msra.mxu0 0.0
        %629 = vmatprep.subr.mxu0 0.0
        %630 = vmatpush2.msra.mxu0 0.0
        %631 = vmatprep.subr.mxu0 0.0
        %632 = vmatpush2.msra.mxu0 0.0
        %633 = vmatprep.subr.mxu0 0.0
        %634 = vmatpush2.msra.mxu0 0.0
        %635 = vmatprep.subr.mxu0 0.0
        %636 = vmatpush2.msra.mxu0 0.0
        %637 = vmatprep.subr.mxu0 0.0
        %638 = vmatpush2.msra.mxu0 0.0
        %639 = vmatprep.subr.mxu0 0.0
        %640 = vmatpush2.msra.mxu0 0.0
        %641 = vmatprep.subr.mxu0 0.0
        %642 = vmatpush2.msra.mxu0 0.0
        %643 = vmatprep.subr.mxu0 0.0
        %644 = vmatpush2.msra.mxu0 0.0
        %645 = vmatprep.subr.mxu0 0.0
        %646 = vmatpush2.msra.mxu0 0.0
        %647 = vmatprep.subr.mxu0 0.0
        %648 = vmatpush2.msra.mxu0 0.0
        %649 = vmatprep.mubr.f32.mxu0 0.0
        %650 = vmatmul.mubr.f32.gmra.mxu0 %v580
        %v651 = vpop.f32.mrf.mxu0
        %v652 = vadd.f32 %v578, %v651
        %v653 = vpop.f32.mrf.mxu0
        %654 = vmatprep.mubr.f32.mxu0 0.0
        %655 = vmatmul.mubr.f32.gmra.mxu0 %v583
        %v656 = vpop.f32.mrf.mxu0
        %v657 = vadd.f32 %v578, %v656
        %v658 = vpop.f32.mrf.mxu0
        %659 = vdwg.mxu0
        %v660 = vmax.f32 %v652, 0.0
        %v661 = vmax.f32 %v657, 0.0
        %s662 = scalar_lea.vmem %s3, 128
        %v663 = vld [vmem:[%s662] sm:$0xff]
        %v664 = vld [vmem:[%s662 + $0x8] sm:$0xff]
        %v665 = vld [vmem:[%s662 + $0x10] sm:$0xff]
        %v666 = vld [vmem:[%s662 + $0x18] sm:$0xff]
        %v667 = vld [vmem:[%s662 + $0x20] sm:$0xff]
        %v668 = vld [vmem:[%s662 + $0x28] sm:$0xff]
        %v669 = vld [vmem:[%s662 + $0x30] sm:$0xff]
        %v670 = vld [vmem:[%s662 + $0x38] sm:$0xff]
        %v671 = vlaneseq
        %v672 = vshrl.u32 %v671, 7
        %v673 = vsub.s32 2, %v672
        %v674 = vrot.slane %v465, %v673
        %v676 = vsel %vm482, %v660, 0
        %v679 = vsel %vm482, %v661, 0
        %681 = vmatprep.subr.mxu0 0.0
        %682 = vmatpush1.msra.mxu0 0.0
        %683 = vmatprep.subr.mxu0 0.0
        %684 = vmatpush1.msra.mxu0 0.0
        %685 = vmatprep.subr.mxu0 0.0
        %686 = vmatpush1.msra.mxu0 0.0
        %687 = vmatprep.subr.mxu0 0.0
        %688 = vmatpush1.msra.mxu0 0.0
        %689 = vmatprep.subr.mxu0 0.0
        %690 = vmatpush1.msra.mxu0 0.0
        %691 = vmatprep.subr.mxu0 0.0
        %692 = vmatpush1.msra.mxu0 0.0
        %693 = vmatprep.subr.mxu0 0.0
        %694 = vmatpush1.msra.mxu0 0.0
        %695 = vmatprep.subr.mxu0 0.0
        %696 = vmatpush1.msra.mxu0 0.0
        %697 = vmatprep.subr.mxu0 0.0
        %698 = vmatpush1.msra.mxu0 %v670
        %699 = vmatprep.subr.mxu0 0.0
        %700 = vmatpush1.msra.mxu0 %v669
        %701 = vmatprep.subr.mxu0 0.0
        %702 = vmatpush1.msra.mxu0 %v668
        %703 = vmatprep.subr.mxu0 0.0
        %704 = vmatpush1.msra.mxu0 %v667
        %705 = vmatprep.subr.mxu0 0.0
        %706 = vmatpush1.msra.mxu0 %v666
        %707 = vmatprep.subr.mxu0 0.0
        %708 = vmatpush1.msra.mxu0 %v665
        %709 = vmatprep.subr.mxu0 0.0
        %710 = vmatpush1.msra.mxu0 %v664
        %711 = vmatprep.subr.mxu0 0.0
        %712 = vmatpush1.msra.mxu0 %v663
        %713 = vmatprep.subr.mxu0 0.0
        %714 = vmatpush2.msra.mxu0 0.0
        %715 = vmatprep.subr.mxu0 0.0
        %716 = vmatpush2.msra.mxu0 0.0
        %717 = vmatprep.subr.mxu0 0.0
        %718 = vmatpush2.msra.mxu0 0.0
        %719 = vmatprep.subr.mxu0 0.0
        %720 = vmatpush2.msra.mxu0 0.0
        %721 = vmatprep.subr.mxu0 0.0
        %722 = vmatpush2.msra.mxu0 0.0
        %723 = vmatprep.subr.mxu0 0.0
        %724 = vmatpush2.msra.mxu0 0.0
        %725 = vmatprep.subr.mxu0 0.0
        %726 = vmatpush2.msra.mxu0 0.0
        %727 = vmatprep.subr.mxu0 0.0
        %728 = vmatpush2.msra.mxu0 0.0
        %729 = vmatprep.subr.mxu0 0.0
        %730 = vmatpush2.msra.mxu0 0.0
        %731 = vmatprep.subr.mxu0 0.0
        %732 = vmatpush2.msra.mxu0 0.0
        %733 = vmatprep.subr.mxu0 0.0
        %734 = vmatpush2.msra.mxu0 0.0
        %735 = vmatprep.subr.mxu0 0.0
        %736 = vmatpush2.msra.mxu0 0.0
        %737 = vmatprep.subr.mxu0 0.0
        %738 = vmatpush2.msra.mxu0 0.0
        %739 = vmatprep.subr.mxu0 0.0
        %740 = vmatpush2.msra.mxu0 0.0
        %741 = vmatprep.subr.mxu0 0.0
        %742 = vmatpush2.msra.mxu0 0.0
        %743 = vmatprep.subr.mxu0 0.0
        %744 = vmatpush2.msra.mxu0 0.0
        %745 = vmatprep.mubr.f32.mxu0 0.0
        %746 = vmatmul.mubr.f32.gmra.mxu0 %v676
        %v747 = vpop.f32.mrf.mxu0
        %v748 = vadd.f32 %v674, %v747
        %v749 = vpop.f32.mrf.mxu0
        %750 = vmatprep.mubr.f32.mxu0 0.0
        %751 = vmatmul.mubr.f32.gmra.mxu0 %v679
        %v752 = vpop.f32.mrf.mxu0
        %v753 = vadd.f32 %v674, %v752
        %v754 = vpop.f32.mrf.mxu0
        %755 = vdwg.mxu0
        %v756 = vmax.f32 %v748, 0.0
        %v757 = vmax.f32 %v753, 0.0
        %v758 = vld [vmem:[%s4] sm:$0xff]
        %v759 = vld [vmem:[%s4 + $0x8] sm:$0xff]
        %v760 = vld [vmem:[%s4 + $0x10] sm:$0xff]
        %v761 = vld [vmem:[%s4 + $0x18] sm:$0xff]
        %v762 = vld [vmem:[%s4 + $0x20] sm:$0xff]
        %v763 = vld [vmem:[%s4 + $0x28] sm:$0xff]
        %v764 = vld [vmem:[%s4 + $0x30] sm:$0xff]
        %v765 = vld [vmem:[%s4 + $0x38] sm:$0xff]
        %v766 = vld [vmem:[%s4 + $0x40] sm:$0xff]
        %v767 = vld [vmem:[%s4 + $0x48] sm:$0xff]
        %v768 = vld [vmem:[%s4 + $0x50] sm:$0xff]
        %v769 = vld [vmem:[%s4 + $0x58] sm:$0xff]
        %v770 = vld [vmem:[%s4 + $0x60] sm:$0xff]
        %v771 = vld [vmem:[%s4 + $0x68] sm:$0xff]
        %v772 = vld [vmem:[%s4 + $0x70] sm:$0xff]
        %v773 = vld [vmem:[%s4 + $0x78] sm:$0xff]
        %v775 = vlaneseq
        %v776 = vshrl.u32 %v775, 7
        %v777 = vsub.s32 0, %v776
        %v778 = vrot.slane %v467, %v777
        %v779 = vlaneseq
        %v780 = vshrl.u32 %v779, 7
        %v781 = vsub.s32 2, %v780
        %v782 = vrot.slane %v467, %v781
        %v785 = vlaneseq
        %v786 = vshrl.u32 %v785, 7
        %v787 = vsub.s32 0, %v786
        %v788 = vrot.slane %v778, %v787
        %v789 = vlaneseq
        %v790 = vshrl.u32 %v789, 7
        %v791 = vsub.s32 0, %v790
        %v792 = vrot.slane %v782, %v791
        %v794 = vsel %vm482, %v756, 0
        %v797 = vsel %vm482, %v757, 0
        %799 = vmatprep.subr.mxu0 0.0
        %800 = vmatpush1.msra.mxu0 0.0
        %801 = vmatprep.subr.mxu0 0.0
        %802 = vmatpush1.msra.mxu0 0.0
        %803 = vmatprep.subr.mxu0 0.0
        %804 = vmatpush1.msra.mxu0 0.0
        %805 = vmatprep.subr.mxu0 0.0
        %806 = vmatpush1.msra.mxu0 0.0
        %807 = vmatprep.subr.mxu0 0.0
        %808 = vmatpush1.msra.mxu0 0.0
        %809 = vmatprep.subr.mxu0 0.0
        %810 = vmatpush1.msra.mxu0 0.0
        %811 = vmatprep.subr.mxu0 0.0
        %812 = vmatpush1.msra.mxu0 0.0
        %813 = vmatprep.subr.mxu0 0.0
        %814 = vmatpush1.msra.mxu0 0.0
        %815 = vmatprep.subr.mxu0 %v773
        %816 = vmatpush1.msra.mxu0 %v772
        %817 = vmatprep.subr.mxu0 %v771
        %818 = vmatpush1.msra.mxu0 %v770
        %819 = vmatprep.subr.mxu0 %v769
        %820 = vmatpush1.msra.mxu0 %v768
        %821 = vmatprep.subr.mxu0 %v767
        %822 = vmatpush1.msra.mxu0 %v766
        %823 = vmatprep.subr.mxu0 %v765
        %824 = vmatpush1.msra.mxu0 %v764
        %825 = vmatprep.subr.mxu0 %v763
        %826 = vmatpush1.msra.mxu0 %v762
        %827 = vmatprep.subr.mxu0 %v761
        %828 = vmatpush1.msra.mxu0 %v760
        %829 = vmatprep.subr.mxu0 %v759
        %830 = vmatpush1.msra.mxu0 %v758
        %831 = vmatprep.subr.mxu0 0.0
        %832 = vmatpush2.msra.mxu0 0.0
        %833 = vmatprep.subr.mxu0 0.0
        %834 = vmatpush2.msra.mxu0 0.0
        %835 = vmatprep.subr.mxu0 0.0
        %836 = vmatpush2.msra.mxu0 0.0
        %837 = vmatprep.subr.mxu0 0.0
        %838 = vmatpush2.msra.mxu0 0.0
        %839 = vmatprep.subr.mxu0 0.0
        %840 = vmatpush2.msra.mxu0 0.0
        %841 = vmatprep.subr.mxu0 0.0
        %842 = vmatpush2.msra.mxu0 0.0
        %843 = vmatprep.subr.mxu0 0.0
        %844 = vmatpush2.msra.mxu0 0.0
        %845 = vmatprep.subr.mxu0 0.0
        %846 = vmatpush2.msra.mxu0 0.0
        %847 = vmatprep.subr.mxu0 0.0
        %848 = vmatpush2.msra.mxu0 0.0
        %849 = vmatprep.subr.mxu0 0.0
        %850 = vmatpush2.msra.mxu0 0.0
        %851 = vmatprep.subr.mxu0 0.0
        %852 = vmatpush2.msra.mxu0 0.0
        %853 = vmatprep.subr.mxu0 0.0
        %854 = vmatpush2.msra.mxu0 0.0
        %855 = vmatprep.subr.mxu0 0.0
        %856 = vmatpush2.msra.mxu0 0.0
        %857 = vmatprep.subr.mxu0 0.0
        %858 = vmatpush2.msra.mxu0 0.0
        %859 = vmatprep.subr.mxu0 0.0
        %860 = vmatpush2.msra.mxu0 0.0
        %861 = vmatprep.subr.mxu0 0.0
        %862 = vmatpush2.msra.mxu0 0.0
        %863 = vmatprep.mubr.f32.mxu0 0.0
        %864 = vmatmul.mubr.f32.gmra.mxu0 %v794
        %v865 = vpop.f32.mrf.mxu0
        %v866 = vadd.f32 %v788, %v865
        %v867 = vpop.f32.mrf.mxu0
        %v868 = vadd.f32 %v792, %v867
        %869 = vmatprep.mubr.f32.mxu0 0.0
        %870 = vmatmul.mubr.f32.gmra.mxu0 %v797
        %v871 = vpop.f32.mrf.mxu0
        %v872 = vadd.f32 %v788, %v871
        %v873 = vpop.f32.mrf.mxu0
        %v874 = vadd.f32 %v792, %v873
        %875 = vdwg.mxu0
        %v876 = vmax.f32 %v866, 0.0
        %v877 = vmax.f32 %v868, 0.0
        %v878 = vmax.f32 %v872, 0.0
        %v879 = vmax.f32 %v874, 0.0
        %v880 = vld [vmem:[%s449] sm:$0xff]
        %v881 = vld [vmem:[%s449 + $0x8] sm:$0xff]
        %v882 = vld [vmem:[%s449 + $0x10] sm:$0xff]
        %v883 = vld [vmem:[%s449 + $0x18] sm:$0xff]
        %v884 = vld [vmem:[%s5] sm:$0xff]
        %v885 = vld [vmem:[%s5 + $0x8] sm:$0xff]
        %v886 = vld [vmem:[%s5 + $0x10] sm:$0xff]
        %v887 = vld [vmem:[%s5 + $0x18] sm:$0xff]
        %v888 = vld [vmem:[%s5 + $0x20] sm:$0xff]
        %v889 = vld [vmem:[%s5 + $0x28] sm:$0xff]
        %v890 = vld [vmem:[%s5 + $0x30] sm:$0xff]
        %v891 = vld [vmem:[%s5 + $0x38] sm:$0xff]
        %v892 = vld [vmem:[%s5 + $0x40] sm:$0xff]
        %v893 = vld [vmem:[%s5 + $0x48] sm:$0xff]
        %v894 = vld [vmem:[%s5 + $0x50] sm:$0xff]
        %v895 = vld [vmem:[%s5 + $0x58] sm:$0xff]
        %v896 = vld [vmem:[%s5 + $0x60] sm:$0xff]
        %v897 = vld [vmem:[%s5 + $0x68] sm:$0xff]
        %v898 = vld [vmem:[%s5 + $0x70] sm:$0xff]
        %v899 = vld [vmem:[%s5 + $0x78] sm:$0xff]
        %v900 = vld [vmem:[%s5 + $0x80] sm:$0xff]
        %v901 = vld [vmem:[%s5 + $0x88] sm:$0xff]
        %v902 = vld [vmem:[%s5 + $0x90] sm:$0xff]
        %v903 = vld [vmem:[%s5 + $0x98] sm:$0xff]
        %v904 = vld [vmem:[%s5 + $0xa0] sm:$0xff]
        %v905 = vld [vmem:[%s5 + $0xa8] sm:$0xff]
        %v906 = vld [vmem:[%s5 + $0xb0] sm:$0xf]
        %v907 = vlaneseq
        %v908 = vshrl.u32 %v907, 7
        %v909 = vsub.s32 3, %v908
        %v910 = vrot.slane %v465, %v909
        %vm911 = vcmask 424960
        %v913 = vsel %vm911, %v881, 0
        %v916 = vsel %vm911, %v883, 0
        %vm918 = vcmask 1043456
        %v920 = vsel %vm918, %v906, 0
        %922 = vmatprep.subr.mxu0 0.0
        %923 = vmatpush1.msra.mxu0 %v899
        %924 = vmatprep.subr.mxu0 0.0
        %925 = vmatpush1.msra.mxu0 %v898
        %926 = vmatprep.subr.mxu0 0.0
        %927 = vmatpush1.msra.mxu0 %v897
        %928 = vmatprep.subr.mxu0 0.0
        %929 = vmatpush1.msra.mxu0 %v896
        %930 = vmatprep.subr.mxu0 0.0
        %931 = vmatpush1.msra.mxu0 %v895
        %932 = vmatprep.subr.mxu0 0.0
        %933 = vmatpush1.msra.mxu0 %v894
        %934 = vmatprep.subr.mxu0 0.0
        %935 = vmatpush1.msra.mxu0 %v893
        %936 = vmatprep.subr.mxu0 0.0
        %937 = vmatpush1.msra.mxu0 %v892
        %938 = vmatprep.subr.mxu0 0.0
        %939 = vmatpush1.msra.mxu0 %v891
        %940 = vmatprep.subr.mxu0 0.0
        %941 = vmatpush1.msra.mxu0 %v890
        %942 = vmatprep.subr.mxu0 0.0
        %943 = vmatpush1.msra.mxu0 %v889
        %944 = vmatprep.subr.mxu0 0.0
        %945 = vmatpush1.msra.mxu0 %v888
        %946 = vmatprep.subr.mxu0 0.0
        %947 = vmatpush1.msra.mxu0 %v887
        %948 = vmatprep.subr.mxu0 0.0
        %949 = vmatpush1.msra.mxu0 %v886
        %950 = vmatprep.subr.mxu0 0.0
        %951 = vmatpush1.msra.mxu0 %v885
        %952 = vmatprep.subr.mxu0 0.0
        %953 = vmatpush1.msra.mxu0 %v884
        %954 = vmatprep.subr.mxu0 0.0
        %955 = vmatpush2.msra.mxu0 0.0
        %956 = vmatprep.subr.mxu0 0.0
        %957 = vmatpush2.msra.mxu0 0.0
        %958 = vmatprep.subr.mxu0 0.0
        %959 = vmatpush2.msra.mxu0 0.0
        %960 = vmatprep.subr.mxu0 0.0
        %961 = vmatpush2.msra.mxu0 0.0
        %962 = vmatprep.subr.mxu0 0.0
        %963 = vmatpush2.msra.mxu0 0.0
        %964 = vmatprep.subr.mxu0 0.0
        %965 = vmatpush2.msra.mxu0 0.0
        %966 = vmatprep.subr.mxu0 0.0
        %967 = vmatpush2.msra.mxu0 0.0
        %968 = vmatprep.subr.mxu0 0.0
        %969 = vmatpush2.msra.mxu0 0.0
        %970 = vmatprep.subr.mxu0 0.0
        %971 = vmatpush2.msra.mxu0 0.0
        %972 = vmatprep.subr.mxu0 0.0
        %973 = vmatpush2.msra.mxu0 %v920
        %974 = vmatprep.subr.mxu0 0.0
        %975 = vmatpush2.msra.mxu0 %v905
        %976 = vmatprep.subr.mxu0 0.0
        %977 = vmatpush2.msra.mxu0 %v904
        %978 = vmatprep.subr.mxu0 0.0
        %979 = vmatpush2.msra.mxu0 %v903
        %980 = vmatprep.subr.mxu0 0.0
        %981 = vmatpush2.msra.mxu0 %v902
        %982 = vmatprep.subr.mxu0 0.0
        %983 = vmatpush2.msra.mxu0 %v901
        %984 = vmatprep.subr.mxu0 0.0
        %985 = vmatpush2.msra.mxu0 %v900
        %986 = vmatprep.mubr.f32.mxu0 %v913
        %987 = vmatmul.mubr.f32.gmra.mxu0 %v880
        %v988 = vpop.f32.mrf.mxu0
        %v989 = vadd.f32 %v910, %v988
        %v990 = vpop.f32.mrf.mxu0
        %991 = vmatprep.mubr.f32.mxu0 %v916
        %992 = vmatmul.mubr.f32.gmra.mxu0 %v882
        %v993 = vpop.f32.mrf.mxu0
        %v994 = vadd.f32 %v910, %v993
        %v995 = vpop.f32.mrf.mxu0
        %996 = vdwg.mxu0
        %v997 = vmax.f32 %v989, 0.0
        %v998 = vmax.f32 %v994, 0.0
        %v999 = vld [vmem:[%s456] sm:$0xff]
        %v1000 = vld [vmem:[%s456 + $0x8] sm:$0xff]
        %v1001 = vld [vmem:[%s456 + $0x10] sm:$0xff]
        %v1002 = vld [vmem:[%s456 + $0x18] sm:$0xff]
        %s1003 = scalar_lea.vmem %s5, 184
        %v1004 = vld [vmem:[%s1003] sm:$0xff]
        %v1005 = vld [vmem:[%s1003 + $0x8] sm:$0xff]
        %v1006 = vld [vmem:[%s1003 + $0x10] sm:$0xff]
        %v1007 = vld [vmem:[%s1003 + $0x18] sm:$0xff]
        %v1008 = vld [vmem:[%s1003 + $0x20] sm:$0xff]
        %v1009 = vld [vmem:[%s1003 + $0x28] sm:$0xff]
        %v1010 = vld [vmem:[%s1003 + $0x30] sm:$0xff]
        %v1011 = vld [vmem:[%s1003 + $0x38] sm:$0xff]
        %v1012 = vld [vmem:[%s1003 + $0x40] sm:$0xff]
        %v1013 = vld [vmem:[%s1003 + $0x48] sm:$0xff]
        %v1014 = vld [vmem:[%s1003 + $0x50] sm:$0xff]
        %v1015 = vld [vmem:[%s1003 + $0x58] sm:$0xff]
        %v1016 = vld [vmem:[%s1003 + $0x60] sm:$0xff]
        %v1017 = vld [vmem:[%s1003 + $0x68] sm:$0xff]
        %v1018 = vld [vmem:[%s1003 + $0x70] sm:$0xff]
        %v1019 = vld [vmem:[%s1003 + $0x78] sm:$0xff]
        %v1020 = vld [vmem:[%s1003 + $0x80] sm:$0xff]
        %v1021 = vld [vmem:[%s1003 + $0x88] sm:$0xff]
        %v1022 = vld [vmem:[%s1003 + $0x90] sm:$0xff]
        %v1023 = vld [vmem:[%s1003 + $0x98] sm:$0xff]
        %v1024 = vld [vmem:[%s1003 + $0xa0] sm:$0xff]
        %v1025 = vld [vmem:[%s1003 + $0xa8] sm:$0xff]
        %v1026 = vld [vmem:[%s1003 + $0xb0] sm:$0xf]
        %v1027 = vlaneseq
        %v1028 = vshrl.u32 %v1027, 7
        %v1029 = vsub.s32 4, %v1028
        %v1030 = vrot.slane %v465, %v1029
        %v1032 = vsel %vm911, %v1000, 0
        %v1035 = vsel %vm911, %v1002, 0
        %v1038 = vsel %vm918, %v1026, 0
        %1040 = vmatprep.subr.mxu0 0.0
        %1041 = vmatpush1.msra.mxu0 %v1019
        %1042 = vmatprep.subr.mxu0 0.0
        %1043 = vmatpush1.msra.mxu0 %v1018
        %1044 = vmatprep.subr.mxu0 0.0
        %1045 = vmatpush1.msra.mxu0 %v1017
        %1046 = vmatprep.subr.mxu0 0.0
        %1047 = vmatpush1.msra.mxu0 %v1016
        %1048 = vmatprep.subr.mxu0 0.0
        %1049 = vmatpush1.msra.mxu0 %v1015
        %1050 = vmatprep.subr.mxu0 0.0
        %1051 = vmatpush1.msra.mxu0 %v1014
        %1052 = vmatprep.subr.mxu0 0.0
        %1053 = vmatpush1.msra.mxu0 %v1013
        %1054 = vmatprep.subr.mxu0 0.0
        %1055 = vmatpush1.msra.mxu0 %v1012
        %1056 = vmatprep.subr.mxu0 0.0
        %1057 = vmatpush1.msra.mxu0 %v1011
        %1058 = vmatprep.subr.mxu0 0.0
        %1059 = vmatpush1.msra.mxu0 %v1010
        %1060 = vmatprep.subr.mxu0 0.0
        %1061 = vmatpush1.msra.mxu0 %v1009
        %1062 = vmatprep.subr.mxu0 0.0
        %1063 = vmatpush1.msra.mxu0 %v1008
        %1064 = vmatprep.subr.mxu0 0.0
        %1065 = vmatpush1.msra.mxu0 %v1007
        %1066 = vmatprep.subr.mxu0 0.0
        %1067 = vmatpush1.msra.mxu0 %v1006
        %1068 = vmatprep.subr.mxu0 0.0
        %1069 = vmatpush1.msra.mxu0 %v1005
        %1070 = vmatprep.subr.mxu0 0.0
        %1071 = vmatpush1.msra.mxu0 %v1004
        %1072 = vmatprep.subr.mxu0 0.0
        %1073 = vmatpush2.msra.mxu0 0.0
        %1074 = vmatprep.subr.mxu0 0.0
        %1075 = vmatpush2.msra.mxu0 0.0
        %1076 = vmatprep.subr.mxu0 0.0
        %1077 = vmatpush2.msra.mxu0 0.0
        %1078 = vmatprep.subr.mxu0 0.0
        %1079 = vmatpush2.msra.mxu0 0.0
        %1080 = vmatprep.subr.mxu0 0.0
        %1081 = vmatpush2.msra.mxu0 0.0
        %1082 = vmatprep.subr.mxu0 0.0
        %1083 = vmatpush2.msra.mxu0 0.0
        %1084 = vmatprep.subr.mxu0 0.0
        %1085 = vmatpush2.msra.mxu0 0.0
        %1086 = vmatprep.subr.mxu0 0.0
        %1087 = vmatpush2.msra.mxu0 0.0
        %1088 = vmatprep.subr.mxu0 0.0
        %1089 = vmatpush2.msra.mxu0 0.0
        %1090 = vmatprep.subr.mxu0 0.0
        %1091 = vmatpush2.msra.mxu0 %v1038
        %1092 = vmatprep.subr.mxu0 0.0
        %1093 = vmatpush2.msra.mxu0 %v1025
        %1094 = vmatprep.subr.mxu0 0.0
        %1095 = vmatpush2.msra.mxu0 %v1024
        %1096 = vmatprep.subr.mxu0 0.0
        %1097 = vmatpush2.msra.mxu0 %v1023
        %1098 = vmatprep.subr.mxu0 0.0
        %1099 = vmatpush2.msra.mxu0 %v1022
        %1100 = vmatprep.subr.mxu0 0.0
        %1101 = vmatpush2.msra.mxu0 %v1021
        %1102 = vmatprep.subr.mxu0 0.0
        %1103 = vmatpush2.msra.mxu0 %v1020
        %1104 = vmatprep.mubr.f32.mxu0 %v1032
        %1105 = vmatmul.mubr.f32.gmra.mxu0 %v999
        %v1106 = vpop.f32.mrf.mxu0
        %v1107 = vadd.f32 %v1030, %v1106
        %v1108 = vpop.f32.mrf.mxu0
        %1109 = vmatprep.mubr.f32.mxu0 %v1035
        %1110 = vmatmul.mubr.f32.gmra.mxu0 %v1001
        %v1111 = vpop.f32.mrf.mxu0
        %v1112 = vadd.f32 %v1030, %v1111
        %v1113 = vpop.f32.mrf.mxu0
        %1114 = vdwg.mxu0
        %v1115 = vmax.f32 %v1107, 0.0
        %v1116 = vmax.f32 %v1112, 0.0
        %v1117 = vld [vmem:[%s6] sm:$0xff]
        %v1118 = vld [vmem:[%s6 + $0x8] sm:$0xff]
        %v1119 = vld [vmem:[%s6 + $0x10] sm:$0xff]
        %v1120 = vld [vmem:[%s6 + $0x18] sm:$0xff]
        %v1121 = vld [vmem:[%s6 + $0x20] sm:$0xff]
        %v1122 = vld [vmem:[%s6 + $0x28] sm:$0xff]
        %v1123 = vld [vmem:[%s6 + $0x30] sm:$0xff]
        %v1124 = vld [vmem:[%s6 + $0x38] sm:$0xff]
        %v1125 = vld [vmem:[%s6 + $0x40] sm:$0xff]
        %v1126 = vld [vmem:[%s6 + $0x48] sm:$0xff]
        %v1127 = vld [vmem:[%s6 + $0x50] sm:$0xff]
        %v1128 = vld [vmem:[%s6 + $0x58] sm:$0xff]
        %v1129 = vld [vmem:[%s6 + $0x60] sm:$0xff]
        %v1130 = vld [vmem:[%s6 + $0x68] sm:$0xff]
        %v1131 = vld [vmem:[%s6 + $0x70] sm:$0xff]
        %v1132 = vld [vmem:[%s6 + $0x78] sm:$0xff]
        %v1133 = vld [vmem:[%s6 + $0x80] sm:$0xff]
        %v1134 = vld [vmem:[%s6 + $0x88] sm:$0xff]
        %v1135 = vld [vmem:[%s6 + $0x90] sm:$0xff]
        %v1136 = vld [vmem:[%s6 + $0x98] sm:$0xff]
        %v1137 = vld [vmem:[%s6 + $0xa0] sm:$0xff]
        %v1138 = vld [vmem:[%s6 + $0xa8] sm:$0xff]
        %v1139 = vld [vmem:[%s6 + $0xb0] sm:$0xff]
        %v1140 = vld [vmem:[%s6 + $0xb8] sm:$0xff]
        %v1141 = vld [vmem:[%s6 + $0xc0] sm:$0xff]
        %v1142 = vld [vmem:[%s6 + $0xc8] sm:$0xff]
        %v1143 = vld [vmem:[%s6 + $0xd0] sm:$0xff]
        %v1144 = vld [vmem:[%s6 + $0xd8] sm:$0xff]
        %v1145 = vld [vmem:[%s6 + $0xe0] sm:$0xff]
        %v1146 = vld [vmem:[%s6 + $0xe8] sm:$0xff]
        %v1147 = vld [vmem:[%s6 + $0xf0] sm:$0xff]
        %v1148 = vld [vmem:[%s6 + $0xf8] sm:$0xff]
        %v1150 = vsel %vm482, %v1115, 0
        %v1153 = vsel %vm482, %v1116, 0
        %1155 = vmatprep.subr.mxu0 0.0
        %1156 = vmatpush1.msra.mxu0 0.0
        %1157 = vmatprep.subr.mxu0 0.0
        %1158 = vmatpush1.msra.mxu0 0.0
        %1159 = vmatprep.subr.mxu0 0.0
        %1160 = vmatpush1.msra.mxu0 0.0
        %1161 = vmatprep.subr.mxu0 0.0
        %1162 = vmatpush1.msra.mxu0 0.0
        %1163 = vmatprep.subr.mxu0 0.0
        %1164 = vmatpush1.msra.mxu0 0.0
        %1165 = vmatprep.subr.mxu0 0.0
        %1166 = vmatpush1.msra.mxu0 0.0
        %1167 = vmatprep.subr.mxu0 0.0
        %1168 = vmatpush1.msra.mxu0 0.0
        %1169 = vmatprep.subr.mxu0 0.0
        %1170 = vmatpush1.msra.mxu0 0.0
        %1171 = vmatprep.subr.mxu0 %v1148
        %1172 = vmatpush1.msra.mxu0 %v1147
        %1173 = vmatprep.subr.mxu0 %v1146
        %1174 = vmatpush1.msra.mxu0 %v1145
        %1175 = vmatprep.subr.mxu0 %v1144
        %1176 = vmatpush1.msra.mxu0 %v1143
        %1177 = vmatprep.subr.mxu0 %v1142
        %1178 = vmatpush1.msra.mxu0 %v1141
        %1179 = vmatprep.subr.mxu0 %v1140
        %1180 = vmatpush1.msra.mxu0 %v1139
        %1181 = vmatprep.subr.mxu0 %v1138
        %1182 = vmatpush1.msra.mxu0 %v1137
        %1183 = vmatprep.subr.mxu0 %v1136
        %1184 = vmatpush1.msra.mxu0 %v1135
        %1185 = vmatprep.subr.mxu0 %v1134
        %1186 = vmatpush1.msra.mxu0 %v1133
        %1187 = vmatprep.subr.mxu0 0.0
        %1188 = vmatpush2.msra.mxu0 0.0
        %1189 = vmatprep.subr.mxu0 0.0
        %1190 = vmatpush2.msra.mxu0 0.0
        %1191 = vmatprep.subr.mxu0 0.0
        %1192 = vmatpush2.msra.mxu0 0.0
        %1193 = vmatprep.subr.mxu0 0.0
        %1194 = vmatpush2.msra.mxu0 0.0
        %1195 = vmatprep.subr.mxu0 0.0
        %1196 = vmatpush2.msra.mxu0 0.0
        %1197 = vmatprep.subr.mxu0 0.0
        %1198 = vmatpush2.msra.mxu0 0.0
        %1199 = vmatprep.subr.mxu0 0.0
        %1200 = vmatpush2.msra.mxu0 0.0
        %1201 = vmatprep.subr.mxu0 0.0
        %1202 = vmatpush2.msra.mxu0 0.0
        %1203 = vmatprep.subr.mxu0 0.0
        %1204 = vmatpush2.msra.mxu0 0.0
        %1205 = vmatprep.subr.mxu0 0.0
        %1206 = vmatpush2.msra.mxu0 0.0
        %1207 = vmatprep.subr.mxu0 0.0
        %1208 = vmatpush2.msra.mxu0 0.0
        %1209 = vmatprep.subr.mxu0 0.0
        %1210 = vmatpush2.msra.mxu0 0.0
        %1211 = vmatprep.subr.mxu0 0.0
        %1212 = vmatpush2.msra.mxu0 0.0
        %1213 = vmatprep.subr.mxu0 0.0
        %1214 = vmatpush2.msra.mxu0 0.0
        %1215 = vmatprep.subr.mxu0 0.0
        %1216 = vmatpush2.msra.mxu0 0.0
        %1217 = vmatprep.subr.mxu0 0.0
        %1218 = vmatpush2.msra.mxu0 0.0
        %1219 = vmatprep.mubr.f32.mxu0 0.0
        %1220 = vmatmul.mubr.f32.gmra.mxu0 %v1150
        %v1221 = vpop.f32.mrf.mxu0
        %v1222 = vadd.f32 0.0, %v1221
        %v1223 = vpop.f32.mrf.mxu0
        %v1224 = vadd.f32 0.0, %v1223
        %1225 = vmatprep.mubr.f32.mxu0 0.0
        %1226 = vmatmul.mubr.f32.gmra.mxu0 %v1153
        %v1227 = vpop.f32.mrf.mxu0
        %v1228 = vadd.f32 0.0, %v1227
        %v1229 = vpop.f32.mrf.mxu0
        %v1230 = vadd.f32 0.0, %v1229
        %1231 = vdwg.mxu0
        %v1233 = vsel %vm482, %v997, 0
        %v1236 = vsel %vm482, %v998, 0
        %1238 = vmatprep.subr.mxu0 0.0
        %1239 = vmatpush1.msra.mxu0 0.0
        %1240 = vmatprep.subr.mxu0 0.0
        %1241 = vmatpush1.msra.mxu0 0.0
        %1242 = vmatprep.subr.mxu0 0.0
        %1243 = vmatpush1.msra.mxu0 0.0
        %1244 = vmatprep.subr.mxu0 0.0
        %1245 = vmatpush1.msra.mxu0 0.0
        %1246 = vmatprep.subr.mxu0 0.0
        %1247 = vmatpush1.msra.mxu0 0.0
        %1248 = vmatprep.subr.mxu0 0.0
        %1249 = vmatpush1.msra.mxu0 0.0
        %1250 = vmatprep.subr.mxu0 0.0
        %1251 = vmatpush1.msra.mxu0 0.0
        %1252 = vmatprep.subr.mxu0 0.0
        %1253 = vmatpush1.msra.mxu0 0.0
        %1254 = vmatprep.subr.mxu0 %v1132
        %1255 = vmatpush1.msra.mxu0 %v1131
        %1256 = vmatprep.subr.mxu0 %v1130
        %1257 = vmatpush1.msra.mxu0 %v1129
        %1258 = vmatprep.subr.mxu0 %v1128
        %1259 = vmatpush1.msra.mxu0 %v1127
        %1260 = vmatprep.subr.mxu0 %v1126
        %1261 = vmatpush1.msra.mxu0 %v1125
        %1262 = vmatprep.subr.mxu0 %v1124
        %1263 = vmatpush1.msra.mxu0 %v1123
        %1264 = vmatprep.subr.mxu0 %v1122
        %1265 = vmatpush1.msra.mxu0 %v1121
        %1266 = vmatprep.subr.mxu0 %v1120
        %1267 = vmatpush1.msra.mxu0 %v1119
        %1268 = vmatprep.subr.mxu0 %v1118
        %1269 = vmatpush1.msra.mxu0 %v1117
        %1270 = vmatprep.subr.mxu0 0.0
        %1271 = vmatpush2.msra.mxu0 0.0
        %1272 = vmatprep.subr.mxu0 0.0
        %1273 = vmatpush2.msra.mxu0 0.0
        %1274 = vmatprep.subr.mxu0 0.0
        %1275 = vmatpush2.msra.mxu0 0.0
        %1276 = vmatprep.subr.mxu0 0.0
        %1277 = vmatpush2.msra.mxu0 0.0
        %1278 = vmatprep.subr.mxu0 0.0
        %1279 = vmatpush2.msra.mxu0 0.0
        %1280 = vmatprep.subr.mxu0 0.0
        %1281 = vmatpush2.msra.mxu0 0.0
        %1282 = vmatprep.subr.mxu0 0.0
        %1283 = vmatpush2.msra.mxu0 0.0
        %1284 = vmatprep.subr.mxu0 0.0
        %1285 = vmatpush2.msra.mxu0 0.0
        %1286 = vmatprep.subr.mxu0 0.0
        %1287 = vmatpush2.msra.mxu0 0.0
        %1288 = vmatprep.subr.mxu0 0.0
        %1289 = vmatpush2.msra.mxu0 0.0
        %1290 = vmatprep.subr.mxu0 0.0
        %1291 = vmatpush2.msra.mxu0 0.0
        %1292 = vmatprep.subr.mxu0 0.0
        %1293 = vmatpush2.msra.mxu0 0.0
        %1294 = vmatprep.subr.mxu0 0.0
        %1295 = vmatpush2.msra.mxu0 0.0
        %1296 = vmatprep.subr.mxu0 0.0
        %1297 = vmatpush2.msra.mxu0 0.0
        %1298 = vmatprep.subr.mxu0 0.0
        %1299 = vmatpush2.msra.mxu0 0.0
        %1300 = vmatprep.subr.mxu0 0.0
        %1301 = vmatpush2.msra.mxu0 0.0
        %1302 = vmatprep.mubr.f32.mxu0 0.0
        %1303 = vmatmul.mubr.f32.gmra.mxu0 %v1233
        %v1304 = vpop.f32.mrf.mxu0
        %v1305 = vadd.f32 %v1222, %v1304
        %v1306 = vpop.f32.mrf.mxu0
        %v1307 = vadd.f32 %v1224, %v1306
        %1308 = vmatprep.mubr.f32.mxu0 0.0
        %1309 = vmatmul.mubr.f32.gmra.mxu0 %v1236
        %v1310 = vpop.f32.mrf.mxu0
        %v1311 = vadd.f32 %v1228, %v1310
        %v1312 = vpop.f32.mrf.mxu0
        %v1313 = vadd.f32 %v1230, %v1312
        %1314 = vdwg.mxu0
        %v1315 = vlaneseq
        %v1316 = vshrl.u32 %v1315, 7
        %v1317 = vsub.s32 1, %v1316
        %v1318 = vrot.slane %v467, %v1317
        %v1319 = vlaneseq
        %v1320 = vshrl.u32 %v1319, 7
        %v1321 = vsub.s32 3, %v1320
        %v1322 = vrot.slane %v467, %v1321
        %v1325 = vlaneseq
        %v1326 = vshrl.u32 %v1325, 7
        %v1327 = vsub.s32 1, %v1326
        %v1328 = vrot.slane %v1318, %v1327
        %v1329 = vlaneseq
        %v1330 = vshrl.u32 %v1329, 7
        %v1331 = vsub.s32 1, %v1330
        %v1332 = vrot.slane %v1322, %v1331
        %v1333 = vadd.f32 %v1305, %v1328
        %v1334 = vadd.f32 %v1307, %v1332
        %v1335 = vadd.f32 %v1311, %v1328
        %v1336 = vadd.f32 %v1313, %v1332
        %v1337 = vmax.f32 %v1333, 0.0
        %v1338 = vmax.f32 %v1334, 0.0
        %v1339 = vmax.f32 %v1335, 0.0
        %v1340 = vmax.f32 %v1336, 0.0
        %v1341 = vld [vmem:[%s7] sm:$0xff]
        %v1342 = vld [vmem:[%s7 + $0x8] sm:$0xff]
        %v1343 = vld [vmem:[%s7 + $0x10] sm:$0xff]
        %v1344 = vld [vmem:[%s7 + $0x18] sm:$0xff]
        %v1345 = vld [vmem:[%s7 + $0x20] sm:$0xff]
        %v1346 = vld [vmem:[%s7 + $0x28] sm:$0xff]
        %v1347 = vld [vmem:[%s7 + $0x30] sm:$0xff]
        %v1348 = vld [vmem:[%s7 + $0x38] sm:$0xff]
        %v1349 = vld [vmem:[%s7 + $0x40] sm:$0xff]
        %v1350 = vld [vmem:[%s7 + $0x48] sm:$0xff]
        %v1351 = vld [vmem:[%s7 + $0x50] sm:$0xff]
        %v1352 = vld [vmem:[%s7 + $0x58] sm:$0xff]
        %v1353 = vld [vmem:[%s7 + $0x60] sm:$0xff]
        %v1354 = vld [vmem:[%s7 + $0x68] sm:$0xff]
        %v1355 = vld [vmem:[%s7 + $0x70] sm:$0xff]
        %v1356 = vld [vmem:[%s7 + $0x78] sm:$0xff]
        %v1357 = vld [vmem:[%s7 + $0x80] sm:$0xff]
        %v1358 = vld [vmem:[%s7 + $0x88] sm:$0xff]
        %v1359 = vld [vmem:[%s7 + $0x90] sm:$0xff]
        %v1360 = vld [vmem:[%s7 + $0x98] sm:$0xff]
        %v1361 = vld [vmem:[%s7 + $0xa0] sm:$0xff]
        %v1362 = vld [vmem:[%s7 + $0xa8] sm:$0xff]
        %v1363 = vld [vmem:[%s7 + $0xb0] sm:$0xff]
        %v1364 = vld [vmem:[%s7 + $0xb8] sm:$0xff]
        %v1365 = vld [vmem:[%s7 + $0xc0] sm:$0xff]
        %v1366 = vld [vmem:[%s7 + $0xc8] sm:$0xff]
        %v1367 = vld [vmem:[%s7 + $0xd0] sm:$0xff]
        %v1368 = vld [vmem:[%s7 + $0xd8] sm:$0xff]
        %v1369 = vld [vmem:[%s7 + $0xe0] sm:$0xff]
        %v1370 = vld [vmem:[%s7 + $0xe8] sm:$0xff]
        %v1371 = vld [vmem:[%s7 + $0xf0] sm:$0xff]
        %v1372 = vld [vmem:[%s7 + $0xf8] sm:$0xff]
        %v1373 = vld [vmem:[%s7 + $0x100] sm:$0xff]
        %v1374 = vld [vmem:[%s7 + $0x108] sm:$0xff]
        %v1375 = vld [vmem:[%s7 + $0x110] sm:$0xff]
        %v1376 = vld [vmem:[%s7 + $0x118] sm:$0xff]
        %v1377 = vld [vmem:[%s7 + $0x120] sm:$0xff]
        %v1378 = vld [vmem:[%s7 + $0x128] sm:$0xff]
        %v1379 = vld [vmem:[%s7 + $0x130] sm:$0xff]
        %v1380 = vld [vmem:[%s7 + $0x138] sm:$0xff]
        %v1381 = vld [vmem:[%s7 + $0x140] sm:$0xff]
        %v1382 = vld [vmem:[%s7 + $0x148] sm:$0xff]
        %v1383 = vld [vmem:[%s7 + $0x150] sm:$0xff]
        %v1384 = vld [vmem:[%s7 + $0x158] sm:$0xff]
        %v1385 = vld [vmem:[%s7 + $0x160] sm:$0xff]
        %v1386 = vld [vmem:[%s7 + $0x168] sm:$0xff]
        %v1387 = vld [vmem:[%s7 + $0x170] sm:$0xff]
        %v1388 = vld [vmem:[%s7 + $0x178] sm:$0xff]
        %v1389 = vld [vmem:[%s7 + $0x180] sm:$0xff]
        %v1390 = vld [vmem:[%s7 + $0x188] sm:$0xff]
        %v1391 = vld [vmem:[%s7 + $0x190] sm:$0xff]
        %v1392 = vld [vmem:[%s7 + $0x198] sm:$0xff]
        %v1393 = vld [vmem:[%s7 + $0x1a0] sm:$0xff]
        %v1394 = vld [vmem:[%s7 + $0x1a8] sm:$0xff]
        %v1395 = vld [vmem:[%s7 + $0x1b0] sm:$0xff]
        %v1396 = vld [vmem:[%s7 + $0x1b8] sm:$0xff]
        %v1397 = vld [vmem:[%s7 + $0x1c0] sm:$0xff]
        %v1398 = vld [vmem:[%s7 + $0x1c8] sm:$0xff]
        %v1399 = vld [vmem:[%s7 + $0x1d0] sm:$0xff]
        %v1400 = vld [vmem:[%s7 + $0x1d8] sm:$0xff]
        %v1401 = vld [vmem:[%s7 + $0x1e0] sm:$0xff]
        %v1402 = vld [vmem:[%s7 + $0x1e8] sm:$0xff]
        %v1403 = vld [vmem:[%s7 + $0x1f0] sm:$0xff]
        %v1404 = vld [vmem:[%s7 + $0x1f8] sm:$0xff]
        %1405 = vmatprep.subr.mxu0 0.0
        %1406 = vmatpush1.msra.mxu0 %v1388
        %1407 = vmatprep.subr.mxu0 0.0
        %1408 = vmatpush1.msra.mxu0 %v1387
        %1409 = vmatprep.subr.mxu0 0.0
        %1410 = vmatpush1.msra.mxu0 %v1386
        %1411 = vmatprep.subr.mxu0 0.0
        %1412 = vmatpush1.msra.mxu0 %v1385
        %1413 = vmatprep.subr.mxu0 0.0
        %1414 = vmatpush1.msra.mxu0 %v1384
        %1415 = vmatprep.subr.mxu0 0.0
        %1416 = vmatpush1.msra.mxu0 %v1383
        %1417 = vmatprep.subr.mxu0 0.0
        %1418 = vmatpush1.msra.mxu0 %v1382
        %1419 = vmatprep.subr.mxu0 0.0
        %1420 = vmatpush1.msra.mxu0 %v1381
        %1421 = vmatprep.subr.mxu0 0.0
        %1422 = vmatpush1.msra.mxu0 %v1380
        %1423 = vmatprep.subr.mxu0 0.0
        %1424 = vmatpush1.msra.mxu0 %v1379
        %1425 = vmatprep.subr.mxu0 0.0
        %1426 = vmatpush1.msra.mxu0 %v1378
        %1427 = vmatprep.subr.mxu0 0.0
        %1428 = vmatpush1.msra.mxu0 %v1377
        %1429 = vmatprep.subr.mxu0 0.0
        %1430 = vmatpush1.msra.mxu0 %v1376
        %1431 = vmatprep.subr.mxu0 0.0
        %1432 = vmatpush1.msra.mxu0 %v1375
        %1433 = vmatprep.subr.mxu0 0.0
        %1434 = vmatpush1.msra.mxu0 %v1374
        %1435 = vmatprep.subr.mxu0 0.0
        %1436 = vmatpush1.msra.mxu0 %v1373
        %1437 = vmatprep.subr.mxu0 0.0
        %1438 = vmatpush2.msra.mxu0 %v1404
        %1439 = vmatprep.subr.mxu0 0.0
        %1440 = vmatpush2.msra.mxu0 %v1403
        %1441 = vmatprep.subr.mxu0 0.0
        %1442 = vmatpush2.msra.mxu0 %v1402
        %1443 = vmatprep.subr.mxu0 0.0
        %1444 = vmatpush2.msra.mxu0 %v1401
        %1445 = vmatprep.subr.mxu0 0.0
        %1446 = vmatpush2.msra.mxu0 %v1400
        %1447 = vmatprep.subr.mxu0 0.0
        %1448 = vmatpush2.msra.mxu0 %v1399
        %1449 = vmatprep.subr.mxu0 0.0
        %1450 = vmatpush2.msra.mxu0 %v1398
        %1451 = vmatprep.subr.mxu0 0.0
        %1452 = vmatpush2.msra.mxu0 %v1397
        %1453 = vmatprep.subr.mxu0 0.0
        %1454 = vmatpush2.msra.mxu0 %v1396
        %1455 = vmatprep.subr.mxu0 0.0
        %1456 = vmatpush2.msra.mxu0 %v1395
        %1457 = vmatprep.subr.mxu0 0.0
        %1458 = vmatpush2.msra.mxu0 %v1394
        %1459 = vmatprep.subr.mxu0 0.0
        %1460 = vmatpush2.msra.mxu0 %v1393
        %1461 = vmatprep.subr.mxu0 0.0
        %1462 = vmatpush2.msra.mxu0 %v1392
        %1463 = vmatprep.subr.mxu0 0.0
        %1464 = vmatpush2.msra.mxu0 %v1391
        %1465 = vmatprep.subr.mxu0 0.0
        %1466 = vmatpush2.msra.mxu0 %v1390
        %1467 = vmatprep.subr.mxu0 0.0
        %1468 = vmatpush2.msra.mxu0 %v1389
        %1469 = vmatprep.mubr.f32.mxu0 %v877
        %1470 = vmatmul.mubr.f32.gmra.mxu0 %v876
        %v1471 = vpop.f32.mrf.mxu0
        %v1472 = vadd.f32 0.0, %v1471
        %v1473 = vpop.f32.mrf.mxu0
        %1474 = vmatprep.mubr.f32.mxu0 %v879
        %1475 = vmatmul.mubr.f32.gmra.mxu0 %v878
        %v1476 = vpop.f32.mrf.mxu0
        %v1477 = vadd.f32 0.0, %v1476
        %v1478 = vpop.f32.mrf.mxu0
        %1479 = vdwg.mxu0
        %1480 = vmatprep.subr.mxu0 0.0
        %1481 = vmatpush1.msra.mxu0 %v1356
        %1482 = vmatprep.subr.mxu0 0.0
        %1483 = vmatpush1.msra.mxu0 %v1355
        %1484 = vmatprep.subr.mxu0 0.0
        %1485 = vmatpush1.msra.mxu0 %v1354
        %1486 = vmatprep.subr.mxu0 0.0
        %1487 = vmatpush1.msra.mxu0 %v1353
        %1488 = vmatprep.subr.mxu0 0.0
        %1489 = vmatpush1.msra.mxu0 %v1352
        %1490 = vmatprep.subr.mxu0 0.0
        %1491 = vmatpush1.msra.mxu0 %v1351
        %1492 = vmatprep.subr.mxu0 0.0
        %1493 = vmatpush1.msra.mxu0 %v1350
        %1494 = vmatprep.subr.mxu0 0.0
        %1495 = vmatpush1.msra.mxu0 %v1349
        %1496 = vmatprep.subr.mxu0 0.0
        %1497 = vmatpush1.msra.mxu0 %v1348
        %1498 = vmatprep.subr.mxu0 0.0
        %1499 = vmatpush1.msra.mxu0 %v1347
        %1500 = vmatprep.subr.mxu0 0.0
        %1501 = vmatpush1.msra.mxu0 %v1346
        %1502 = vmatprep.subr.mxu0 0.0
        %1503 = vmatpush1.msra.mxu0 %v1345
        %1504 = vmatprep.subr.mxu0 0.0
        %1505 = vmatpush1.msra.mxu0 %v1344
        %1506 = vmatprep.subr.mxu0 0.0
        %1507 = vmatpush1.msra.mxu0 %v1343
        %1508 = vmatprep.subr.mxu0 0.0
        %1509 = vmatpush1.msra.mxu0 %v1342
        %1510 = vmatprep.subr.mxu0 0.0
        %1511 = vmatpush1.msra.mxu0 %v1341
        %1512 = vmatprep.subr.mxu0 0.0
        %1513 = vmatpush2.msra.mxu0 %v1372
        %1514 = vmatprep.subr.mxu0 0.0
        %1515 = vmatpush2.msra.mxu0 %v1371
        %1516 = vmatprep.subr.mxu0 0.0
        %1517 = vmatpush2.msra.mxu0 %v1370
        %1518 = vmatprep.subr.mxu0 0.0
        %1519 = vmatpush2.msra.mxu0 %v1369
        %1520 = vmatprep.subr.mxu0 0.0
        %1521 = vmatpush2.msra.mxu0 %v1368
        %1522 = vmatprep.subr.mxu0 0.0
        %1523 = vmatpush2.msra.mxu0 %v1367
        %1524 = vmatprep.subr.mxu0 0.0
        %1525 = vmatpush2.msra.mxu0 %v1366
        %1526 = vmatprep.subr.mxu0 0.0
        %1527 = vmatpush2.msra.mxu0 %v1365
        %1528 = vmatprep.subr.mxu0 0.0
        %1529 = vmatpush2.msra.mxu0 %v1364
        %1530 = vmatprep.subr.mxu0 0.0
        %1531 = vmatpush2.msra.mxu0 %v1363
        %1532 = vmatprep.subr.mxu0 0.0
        %1533 = vmatpush2.msra.mxu0 %v1362
        %1534 = vmatprep.subr.mxu0 0.0
        %1535 = vmatpush2.msra.mxu0 %v1361
        %1536 = vmatprep.subr.mxu0 0.0
        %1537 = vmatpush2.msra.mxu0 %v1360
        %1538 = vmatprep.subr.mxu0 0.0
        %1539 = vmatpush2.msra.mxu0 %v1359
        %1540 = vmatprep.subr.mxu0 0.0
        %1541 = vmatpush2.msra.mxu0 %v1358
        %1542 = vmatprep.subr.mxu0 0.0
        %1543 = vmatpush2.msra.mxu0 %v1357
        %1544 = vmatprep.mubr.f32.mxu0 %v1338
        %1545 = vmatmul.mubr.f32.gmra.mxu0 %v1337
        %v1546 = vpop.f32.mrf.mxu0
        %v1547 = vadd.f32 %v1472, %v1546
        %v1548 = vpop.f32.mrf.mxu0
        %1549 = vmatprep.mubr.f32.mxu0 %v1340
        %1550 = vmatmul.mubr.f32.gmra.mxu0 %v1339
        %v1551 = vpop.f32.mrf.mxu0
        %v1552 = vadd.f32 %v1477, %v1551
        %v1553 = vpop.f32.mrf.mxu0
        %1554 = vdwg.mxu0
        %v1555 = vlaneseq
        %v1556 = vshrl.u32 %v1555, 7
        %v1557 = vsub.s32 5, %v1556
        %v1558 = vrot.slane %v465, %v1557
        %v1559 = vadd.f32 %v1547, %v1558
        %v1560 = vadd.f32 %v1552, %v1558
        %v1561 = vmax.f32 %v1559, 0.0
        %v1562 = vmax.f32 %v1560, 0.0
        %s1563 = scalar_lea.vmem %s3, 192
        %v1564 = vld [vmem:[%s1563] sm:$0xff]
        %v1565 = vld [vmem:[%s1563 + $0x8] sm:$0xff]
        %v1566 = vld [vmem:[%s1563 + $0x10] sm:$0xff]
        %v1567 = vld [vmem:[%s1563 + $0x18] sm:$0xff]
        %v1568 = vld [vmem:[%s1563 + $0x20] sm:$0xff]
        %v1569 = vld [vmem:[%s1563 + $0x28] sm:$0xff]
        %v1570 = vld [vmem:[%s1563 + $0x30] sm:$0xff]
        %v1571 = vld [vmem:[%s1563 + $0x38] sm:$0xff]
        %v1572 = vlaneseq
        %v1573 = vshrl.u32 %v1572, 7
        %v1574 = vsub.s32 6, %v1573
        %v1575 = vrot.slane %v465, %v1574
        %v1577 = vsel %vm482, %v1561, 0
        %v1580 = vsel %vm482, %v1562, 0
        %1582 = vmatprep.subr.mxu0 0.0
        %1583 = vmatpush1.msra.mxu0 0.0
        %1584 = vmatprep.subr.mxu0 0.0
        %1585 = vmatpush1.msra.mxu0 0.0
        %1586 = vmatprep.subr.mxu0 0.0
        %1587 = vmatpush1.msra.mxu0 0.0
        %1588 = vmatprep.subr.mxu0 0.0
        %1589 = vmatpush1.msra.mxu0 0.0
        %1590 = vmatprep.subr.mxu0 0.0
        %1591 = vmatpush1.msra.mxu0 0.0
        %1592 = vmatprep.subr.mxu0 0.0
        %1593 = vmatpush1.msra.mxu0 0.0
        %1594 = vmatprep.subr.mxu0 0.0
        %1595 = vmatpush1.msra.mxu0 0.0
        %1596 = vmatprep.subr.mxu0 0.0
        %1597 = vmatpush1.msra.mxu0 0.0
        %1598 = vmatprep.subr.mxu0 0.0
        %1599 = vmatpush1.msra.mxu0 %v1571
        %1600 = vmatprep.subr.mxu0 0.0
        %1601 = vmatpush1.msra.mxu0 %v1570
        %1602 = vmatprep.subr.mxu0 0.0
        %1603 = vmatpush1.msra.mxu0 %v1569
        %1604 = vmatprep.subr.mxu0 0.0
        %1605 = vmatpush1.msra.mxu0 %v1568
        %1606 = vmatprep.subr.mxu0 0.0
        %1607 = vmatpush1.msra.mxu0 %v1567
        %1608 = vmatprep.subr.mxu0 0.0
        %1609 = vmatpush1.msra.mxu0 %v1566
        %1610 = vmatprep.subr.mxu0 0.0
        %1611 = vmatpush1.msra.mxu0 %v1565
        %1612 = vmatprep.subr.mxu0 0.0
        %1613 = vmatpush1.msra.mxu0 %v1564
        %1614 = vmatprep.subr.mxu0 0.0
        %1615 = vmatpush2.msra.mxu0 0.0
        %1616 = vmatprep.subr.mxu0 0.0
        %1617 = vmatpush2.msra.mxu0 0.0
        %1618 = vmatprep.subr.mxu0 0.0
        %1619 = vmatpush2.msra.mxu0 0.0
        %1620 = vmatprep.subr.mxu0 0.0
        %1621 = vmatpush2.msra.mxu0 0.0
        %1622 = vmatprep.subr.mxu0 0.0
        %1623 = vmatpush2.msra.mxu0 0.0
        %1624 = vmatprep.subr.mxu0 0.0
        %1625 = vmatpush2.msra.mxu0 0.0
        %1626 = vmatprep.subr.mxu0 0.0
        %1627 = vmatpush2.msra.mxu0 0.0
        %1628 = vmatprep.subr.mxu0 0.0
        %1629 = vmatpush2.msra.mxu0 0.0
        %1630 = vmatprep.subr.mxu0 0.0
        %1631 = vmatpush2.msra.mxu0 0.0
        %1632 = vmatprep.subr.mxu0 0.0
        %1633 = vmatpush2.msra.mxu0 0.0
        %1634 = vmatprep.subr.mxu0 0.0
        %1635 = vmatpush2.msra.mxu0 0.0
        %1636 = vmatprep.subr.mxu0 0.0
        %1637 = vmatpush2.msra.mxu0 0.0
        %1638 = vmatprep.subr.mxu0 0.0
        %1639 = vmatpush2.msra.mxu0 0.0
        %1640 = vmatprep.subr.mxu0 0.0
        %1641 = vmatpush2.msra.mxu0 0.0
        %1642 = vmatprep.subr.mxu0 0.0
        %1643 = vmatpush2.msra.mxu0 0.0
        %1644 = vmatprep.subr.mxu0 0.0
        %1645 = vmatpush2.msra.mxu0 0.0
        %1646 = vmatprep.mubr.f32.mxu0 0.0
        %1647 = vmatmul.mubr.f32.gmra.mxu0 %v1577
        %v1648 = vpop.f32.mrf.mxu0
        %v1649 = vadd.f32 %v1575, %v1648
        %v1650 = vpop.f32.mrf.mxu0
        %1651 = vmatprep.mubr.f32.mxu0 0.0
        %1652 = vmatmul.mubr.f32.gmra.mxu0 %v1580
        %v1653 = vpop.f32.mrf.mxu0
        %v1654 = vadd.f32 %v1575, %v1653
        %v1655 = vpop.f32.mrf.mxu0
        %1656 = vdwg.mxu0
        %v1657 = vmax.f32 %v1649, 0.0
        %v1658 = vmax.f32 %v1654, 0.0
        %s1659 = scalar_lea.vmem %s3, 256
        %v1660 = vld [vmem:[%s1659] sm:$0xff]
        %v1661 = vld [vmem:[%s1659 + $0x8] sm:$0xff]
        %v1662 = vld [vmem:[%s1659 + $0x10] sm:$0xff]
        %v1663 = vld [vmem:[%s1659 + $0x18] sm:$0xff]
        %v1664 = vld [vmem:[%s1659 + $0x20] sm:$0xff]
        %v1665 = vld [vmem:[%s1659 + $0x28] sm:$0xff]
        %v1666 = vld [vmem:[%s1659 + $0x30] sm:$0xff]
        %v1667 = vld [vmem:[%s1659 + $0x38] sm:$0xff]
        %v1668 = vlaneseq
        %v1669 = vshrl.u32 %v1668, 7
        %v1670 = vsub.s32 7, %v1669
        %v1671 = vrot.slane %v465, %v1670
        %v1673 = vsel %vm482, %v1657, 0
        %v1676 = vsel %vm482, %v1658, 0
        %1678 = vmatprep.subr.mxu0 0.0
        %1679 = vmatpush1.msra.mxu0 0.0
        %1680 = vmatprep.subr.mxu0 0.0
        %1681 = vmatpush1.msra.mxu0 0.0
        %1682 = vmatprep.subr.mxu0 0.0
        %1683 = vmatpush1.msra.mxu0 0.0
        %1684 = vmatprep.subr.mxu0 0.0
        %1685 = vmatpush1.msra.mxu0 0.0
        %1686 = vmatprep.subr.mxu0 0.0
        %1687 = vmatpush1.msra.mxu0 0.0
        %1688 = vmatprep.subr.mxu0 0.0
        %1689 = vmatpush1.msra.mxu0 0.0
        %1690 = vmatprep.subr.mxu0 0.0
        %1691 = vmatpush1.msra.mxu0 0.0
        %1692 = vmatprep.subr.mxu0 0.0
        %1693 = vmatpush1.msra.mxu0 0.0
        %1694 = vmatprep.subr.mxu0 0.0
        %1695 = vmatpush1.msra.mxu0 %v1667
        %1696 = vmatprep.subr.mxu0 0.0
        %1697 = vmatpush1.msra.mxu0 %v1666
        %1698 = vmatprep.subr.mxu0 0.0
        %1699 = vmatpush1.msra.mxu0 %v1665
        %1700 = vmatprep.subr.mxu0 0.0
        %1701 = vmatpush1.msra.mxu0 %v1664
        %1702 = vmatprep.subr.mxu0 0.0
        %1703 = vmatpush1.msra.mxu0 %v1663
        %1704 = vmatprep.subr.mxu0 0.0
        %1705 = vmatpush1.msra.mxu0 %v1662
        %1706 = vmatprep.subr.mxu0 0.0
        %1707 = vmatpush1.msra.mxu0 %v1661
        %1708 = vmatprep.subr.mxu0 0.0
        %1709 = vmatpush1.msra.mxu0 %v1660
        %1710 = vmatprep.subr.mxu0 0.0
        %1711 = vmatpush2.msra.mxu0 0.0
        %1712 = vmatprep.subr.mxu0 0.0
        %1713 = vmatpush2.msra.mxu0 0.0
        %1714 = vmatprep.subr.mxu0 0.0
        %1715 = vmatpush2.msra.mxu0 0.0
        %1716 = vmatprep.subr.mxu0 0.0
        %1717 = vmatpush2.msra.mxu0 0.0
        %1718 = vmatprep.subr.mxu0 0.0
        %1719 = vmatpush2.msra.mxu0 0.0
        %1720 = vmatprep.subr.mxu0 0.0
        %1721 = vmatpush2.msra.mxu0 0.0
        %1722 = vmatprep.subr.mxu0 0.0
        %1723 = vmatpush2.msra.mxu0 0.0
        %1724 = vmatprep.subr.mxu0 0.0
        %1725 = vmatpush2.msra.mxu0 0.0
        %1726 = vmatprep.subr.mxu0 0.0
        %1727 = vmatpush2.msra.mxu0 0.0
        %1728 = vmatprep.subr.mxu0 0.0
        %1729 = vmatpush2.msra.mxu0 0.0
        %1730 = vmatprep.subr.mxu0 0.0
        %1731 = vmatpush2.msra.mxu0 0.0
        %1732 = vmatprep.subr.mxu0 0.0
        %1733 = vmatpush2.msra.mxu0 0.0
        %1734 = vmatprep.subr.mxu0 0.0
        %1735 = vmatpush2.msra.mxu0 0.0
        %1736 = vmatprep.subr.mxu0 0.0
        %1737 = vmatpush2.msra.mxu0 0.0
        %1738 = vmatprep.subr.mxu0 0.0
        %1739 = vmatpush2.msra.mxu0 0.0
        %1740 = vmatprep.subr.mxu0 0.0
        %1741 = vmatpush2.msra.mxu0 0.0
        %1742 = vmatprep.mubr.f32.mxu0 0.0
        %1743 = vmatmul.mubr.f32.gmra.mxu0 %v1673
        %v1744 = vpop.f32.mrf.mxu0
        %v1745 = vadd.f32 %v1671, %v1744
        %v1746 = vpop.f32.mrf.mxu0
        %1747 = vmatprep.mubr.f32.mxu0 0.0
        %1748 = vmatmul.mubr.f32.gmra.mxu0 %v1676
        %v1749 = vpop.f32.mrf.mxu0
        %v1750 = vadd.f32 %v1671, %v1749
        %v1751 = vpop.f32.mrf.mxu0
        %1752 = vdwg.mxu0
        %v1753 = vmax.f32 %v1745, 0.0
        %v1754 = vmax.f32 %v1750, 0.0
        %s1755 = scalar_lea.vmem %s3, 320
        %v1756 = vld [vmem:[%s1755] sm:$0xff]
        %v1757 = vld [vmem:[%s1755 + $0x8] sm:$0xff]
        %v1758 = vld [vmem:[%s1755 + $0x10] sm:$0xff]
        %v1759 = vld [vmem:[%s1755 + $0x18] sm:$0xff]
        %v1760 = vld [vmem:[%s1755 + $0x20] sm:$0xff]
        %v1761 = vld [vmem:[%s1755 + $0x28] sm:$0xff]
        %v1762 = vld [vmem:[%s1755 + $0x30] sm:$0xff]
        %v1763 = vld [vmem:[%s1755 + $0x38] sm:$0xff]
        %v1764 = vlaneseq
        %v1765 = vshrl.u32 %v1764, 7
        %v1766 = vsub.s32 0, %v1765
        %v1767 = vrot.slane %v466, %v1766
        %v1769 = vsel %vm482, %v1753, 0
        %v1772 = vsel %vm482, %v1754, 0
        %1774 = vmatprep.subr.mxu0 0.0
        %1775 = vmatpush1.msra.mxu0 0.0
        %1776 = vmatprep.subr.mxu0 0.0
        %1777 = vmatpush1.msra.mxu0 0.0
        %1778 = vmatprep.subr.mxu0 0.0
        %1779 = vmatpush1.msra.mxu0 0.0
        %1780 = vmatprep.subr.mxu0 0.0
        %1781 = vmatpush1.msra.mxu0 0.0
        %1782 = vmatprep.subr.mxu0 0.0
        %1783 = vmatpush1.msra.mxu0 0.0
        %1784 = vmatprep.subr.mxu0 0.0
        %1785 = vmatpush1.msra.mxu0 0.0
        %1786 = vmatprep.subr.mxu0 0.0
        %1787 = vmatpush1.msra.mxu0 0.0
        %1788 = vmatprep.subr.mxu0 0.0
        %1789 = vmatpush1.msra.mxu0 0.0
        %1790 = vmatprep.subr.mxu0 0.0
        %1791 = vmatpush1.msra.mxu0 %v1763
        %1792 = vmatprep.subr.mxu0 0.0
        %1793 = vmatpush1.msra.mxu0 %v1762
        %1794 = vmatprep.subr.mxu0 0.0
        %1795 = vmatpush1.msra.mxu0 %v1761
        %1796 = vmatprep.subr.mxu0 0.0
        %1797 = vmatpush1.msra.mxu0 %v1760
        %1798 = vmatprep.subr.mxu0 0.0
        %1799 = vmatpush1.msra.mxu0 %v1759
        %1800 = vmatprep.subr.mxu0 0.0
        %1801 = vmatpush1.msra.mxu0 %v1758
        %1802 = vmatprep.subr.mxu0 0.0
        %1803 = vmatpush1.msra.mxu0 %v1757
        %1804 = vmatprep.subr.mxu0 0.0
        %1805 = vmatpush1.msra.mxu0 %v1756
        %1806 = vmatprep.subr.mxu0 0.0
        %1807 = vmatpush2.msra.mxu0 0.0
        %1808 = vmatprep.subr.mxu0 0.0
        %1809 = vmatpush2.msra.mxu0 0.0
        %1810 = vmatprep.subr.mxu0 0.0
        %1811 = vmatpush2.msra.mxu0 0.0
        %1812 = vmatprep.subr.mxu0 0.0
        %1813 = vmatpush2.msra.mxu0 0.0
        %1814 = vmatprep.subr.mxu0 0.0
        %1815 = vmatpush2.msra.mxu0 0.0
        %1816 = vmatprep.subr.mxu0 0.0
        %1817 = vmatpush2.msra.mxu0 0.0
        %1818 = vmatprep.subr.mxu0 0.0
        %1819 = vmatpush2.msra.mxu0 0.0
        %1820 = vmatprep.subr.mxu0 0.0
        %1821 = vmatpush2.msra.mxu0 0.0
        %1822 = vmatprep.subr.mxu0 0.0
        %1823 = vmatpush2.msra.mxu0 0.0
        %1824 = vmatprep.subr.mxu0 0.0
        %1825 = vmatpush2.msra.mxu0 0.0
        %1826 = vmatprep.subr.mxu0 0.0
        %1827 = vmatpush2.msra.mxu0 0.0
        %1828 = vmatprep.subr.mxu0 0.0
        %1829 = vmatpush2.msra.mxu0 0.0
        %1830 = vmatprep.subr.mxu0 0.0
        %1831 = vmatpush2.msra.mxu0 0.0
        %1832 = vmatprep.subr.mxu0 0.0
        %1833 = vmatpush2.msra.mxu0 0.0
        %1834 = vmatprep.subr.mxu0 0.0
        %1835 = vmatpush2.msra.mxu0 0.0
        %1836 = vmatprep.subr.mxu0 0.0
        %1837 = vmatpush2.msra.mxu0 0.0
        %1838 = vmatprep.mubr.f32.mxu0 0.0
        %1839 = vmatmul.mubr.f32.gmra.mxu0 %v1769
        %v1840 = vpop.f32.mrf.mxu0
        %v1841 = vadd.f32 %v1767, %v1840
        %v1842 = vpop.f32.mrf.mxu0
        %1843 = vmatprep.mubr.f32.mxu0 0.0
        %1844 = vmatmul.mubr.f32.gmra.mxu0 %v1772
        %v1845 = vpop.f32.mrf.mxu0
        %v1846 = vadd.f32 %v1767, %v1845
        %v1847 = vpop.f32.mrf.mxu0
        %1848 = vdwg.mxu0
        %v1849 = vmax.f32 %v1841, 0.0
        %v1850 = vmax.f32 %v1846, 0.0
        %v1851 = vld [vmem:[%s8] sm:$0xff]
        %v1852 = vld [vmem:[%s8 + $0x8] sm:$0xff]
        %v1853 = vld [vmem:[%s8 + $0x10] sm:$0xff]
        %v1854 = vld [vmem:[%s8 + $0x18] sm:$0xff]
        %v1855 = vld [vmem:[%s8 + $0x20] sm:$0xff]
        %v1856 = vld [vmem:[%s8 + $0x28] sm:$0xff]
        %v1857 = vld [vmem:[%s8 + $0x30] sm:$0xff]
        %v1858 = vld [vmem:[%s8 + $0x38] sm:$0xff]
        %v1859 = vld [vmem:[%s11] sm:$0x1]
        %v1861 = vlaneseq
        %v1862 = vshrl.u32 %v1861, 7
        %v1863 = vsub.s32 0, %v1862
        %v1864 = vrot.slane %v1859, %v1863
        %v1867 = vsel %vm482, %v1849, 0
        %v1870 = vsel %vm482, %v1850, 0
        %1872 = vmatprep.subr.mxu0 0.0
        %1873 = vmatpush1.msra.mxu0 0.0
        %1874 = vmatprep.subr.mxu0 0.0
        %1875 = vmatpush1.msra.mxu0 0.0
        %1876 = vmatprep.subr.mxu0 0.0
        %1877 = vmatpush1.msra.mxu0 0.0
        %1878 = vmatprep.subr.mxu0 0.0
        %1879 = vmatpush1.msra.mxu0 0.0
        %1880 = vmatprep.subr.mxu0 0.0
        %1881 = vmatpush1.msra.mxu0 0.0
        %1882 = vmatprep.subr.mxu0 0.0
        %1883 = vmatpush1.msra.mxu0 0.0
        %1884 = vmatprep.subr.mxu0 0.0
        %1885 = vmatpush1.msra.mxu0 0.0
        %1886 = vmatprep.subr.mxu0 0.0
        %1887 = vmatpush1.msra.mxu0 0.0
        %1888 = vmatprep.subr.mxu0 0.0
        %1889 = vmatpush1.msra.mxu0 %v1858
        %1890 = vmatprep.subr.mxu0 0.0
        %1891 = vmatpush1.msra.mxu0 %v1857
        %1892 = vmatprep.subr.mxu0 0.0
        %1893 = vmatpush1.msra.mxu0 %v1856
        %1894 = vmatprep.subr.mxu0 0.0
        %1895 = vmatpush1.msra.mxu0 %v1855
        %1896 = vmatprep.subr.mxu0 0.0
        %1897 = vmatpush1.msra.mxu0 %v1854
        %1898 = vmatprep.subr.mxu0 0.0
        %1899 = vmatpush1.msra.mxu0 %v1853
        %1900 = vmatprep.subr.mxu0 0.0
        %1901 = vmatpush1.msra.mxu0 %v1852
        %1902 = vmatprep.subr.mxu0 0.0
        %1903 = vmatpush1.msra.mxu0 %v1851
        %1904 = vmatprep.subr.mxu0 0.0
        %1905 = vmatpush2.msra.mxu0 0.0
        %1906 = vmatprep.subr.mxu0 0.0
        %1907 = vmatpush2.msra.mxu0 0.0
        %1908 = vmatprep.subr.mxu0 0.0
        %1909 = vmatpush2.msra.mxu0 0.0
        %1910 = vmatprep.subr.mxu0 0.0
        %1911 = vmatpush2.msra.mxu0 0.0
        %1912 = vmatprep.subr.mxu0 0.0
        %1913 = vmatpush2.msra.mxu0 0.0
        %1914 = vmatprep.subr.mxu0 0.0
        %1915 = vmatpush2.msra.mxu0 0.0
        %1916 = vmatprep.subr.mxu0 0.0
        %1917 = vmatpush2.msra.mxu0 0.0
        %1918 = vmatprep.subr.mxu0 0.0
        %1919 = vmatpush2.msra.mxu0 0.0
        %1920 = vmatprep.subr.mxu0 0.0
        %1921 = vmatpush2.msra.mxu0 0.0
        %1922 = vmatprep.subr.mxu0 0.0
        %1923 = vmatpush2.msra.mxu0 0.0
        %1924 = vmatprep.subr.mxu0 0.0
        %1925 = vmatpush2.msra.mxu0 0.0
        %1926 = vmatprep.subr.mxu0 0.0
        %1927 = vmatpush2.msra.mxu0 0.0
        %1928 = vmatprep.subr.mxu0 0.0
        %1929 = vmatpush2.msra.mxu0 0.0
        %1930 = vmatprep.subr.mxu0 0.0
        %1931 = vmatpush2.msra.mxu0 0.0
        %1932 = vmatprep.subr.mxu0 0.0
        %1933 = vmatpush2.msra.mxu0 0.0
        %1934 = vmatprep.subr.mxu0 0.0
        %1935 = vmatpush2.msra.mxu0 0.0
        %1936 = vmatprep.mubr.f32.mxu0 0.0
        %1937 = vmatmul.mubr.f32.gmra.mxu0 %v1867
        %v1938 = vpop.f32.mrf.mxu0
        %v1939 = vadd.f32 %v1864, %v1938
        %v1940 = vpop.f32.mrf.mxu0
        %1941 = vmatprep.mubr.f32.mxu0 0.0
        %1942 = vmatmul.mubr.f32.gmra.mxu0 %v1870
        %v1943 = vpop.f32.mrf.mxu0
        %v1944 = vadd.f32 %v1864, %v1943
        %v1945 = vpop.f32.mrf.mxu0
        %1946 = vdwg.mxu0
        %v1947 = vxor.u32 %v1939, 2147483648
        %v1948 = vxor.u32 %v1944, 2147483648
        %v1949 = vmul.f32 %v1947, 1.442695
        %v1950 = vpow.pop %v1949
        %v1951 = vmul.f32 %v1948, 1.442695
        %v1952 = vpow.pop %v1951
        %v1953 = vadd.f32 %v1950, 1.0
        %v1954 = vadd.f32 %v1952, 1.0
        %v1955 = vrcp.pop %v1953
        %v1956 = vmul.f32 1.0, %v1955
        %v1957 = vrcp.pop %v1954
        %v1958 = vmul.f32 1.0, %v1957
        %1959 = vst [vmem:[%s443] sm:$0xff] %v1956
        %1960 = vst [vmem:[%s443 + $0x8] sm:$0xff] %v1958
        %s1961 = sand.u32 %s301, 1
        %s1962 = scalar_lea.sflag [#allocation3], %s1961
        %s1963 = sand.u32 %s301, 1
        %s1964 = smul.addr %s1963, 16
        %s1965 = scalar_lea.vmem [#allocation2], %s1964
        // Predicated region
        $region69: #{tpu_custom_call.1} parent=67 // pred_check
          %p1966 = pneg %p311
        $region70: #{tpu_custom_call.1} parent=67 // pred_check_branch
          %1968 = sbr.rel (%p1966) target = $region72
        $region71: #{tpu_custom_call.1} parent=67 // pred_region
          %s1969 = smul.u32 2, %s26
          %s1971 = ssub.s32 256, 256
          %1972 = vsyncadd %s1962, %s1971
          %s1973 = smul.addr %s1969, 128
          %s1974 = scalar_lea.hbm %s12, %s1973
          %s1975 = sshll.u32 %s1965, 4
          %s1976 = int_to_ptr.vmem [resolvable:$true] %s1975
          %1981 = dma.vmem_to_hbm [thread:$0]  %s1976, 256, %s1974, %s1962, 128, 128, 8
        $region72: #{tpu_custom_call.1} parent=67 // pred_fallthru
          _
      $region68: #{tpu_custom_call.1} parent=5 // pred_fallthru
        _
      %p1982 = scmp.le.s32.totalorder 2, %s21
      // Predicated region
      $region73: #{tpu_custom_call.1} parent=5 // pred_check
        %p1983 = pneg %p1982
      $region74: #{tpu_custom_call.1} parent=5 // pred_check_branch
        %1985 = sbr.rel (%p1983) target = $region76
      $region75: #{tpu_custom_call.1} parent=5 // pred_region
        %s1986 = ssub.s32 %s21, 2
        // Predicated region
        $region77: #{tpu_custom_call.1} parent=75 // pred_check
          %p1987 = pneg %p317
        $region78: #{tpu_custom_call.1} parent=75 // pred_check_branch
          %1989 = sbr.rel (%p1987) target = $region80
        $region79: #{tpu_custom_call.1} parent=75 // pred_region
          %s1990 = sand.u32 %s302, 1
          %s1991 = scalar_lea.sflag [#allocation3], %s1990
          %s1992 = sand.u32 %s302, 1
          %s1993 = smul.addr %s1992, 16
          %s1994 = scalar_lea.vmem [#allocation2], %s1993
          %1995 = dma.done %s1991, 256
        $region80: #{tpu_custom_call.1} parent=75 // pred_fallthru
          _
      $region76: #{tpu_custom_call.1} parent=5 // pred_fallthru
        _
    $region6: #{tpu_custom_call.1} parent=1 // loop_footer
      %s25 = sadd.s32 1, %s21
    $region7: #{tpu_custom_call.1} parent=1 // loop_footer_branch
      %20 = sbr.rel target = $region3
    $region8: #{tpu_custom_call.1} parent=1 // loop_exit
      _
    %1996 = vsyncpa [#allocation3], 1
    %s1997 = scalar_lea.sflag [#allocation3], 1
    %1998 = vsyncpa %s1997, 1

</llo_original>
